<compile_context>
chip_gen: v7x
topology: tpu7x:2x2x1
jax: 0.10.0
libtpu: 0.0.40
codegen_flags: <defaults>
</compile_context>

<pallas_src>
import functools

import jax
import jax.numpy as jnp
from jax.experimental import pallas as pl
from jax.experimental.pallas import tpu as pltpu


def _gat_kernel(x_ref, wt_ref, a1_ref, a2_ref, tile_ref, tilet_ref, blk_ref,
                b_ref, adj_ref, o_ref, *, alpha):
    """One batch element per grid point; all H heads fused & batched.

    Block shapes (N nodes, Cin in-feats, H heads, Cout per-head feats,
    HC = H*Cout, HN = H*N):
      x_ref    : (1, N, Cin)  bf16     wt_ref   : (Cin, HC)  bf16
      a1_ref   : (HN, HC)     f32      a2_ref   : (HN, HC)   f32
      tile_ref : (HN, N)      f32      tilet_ref: (N, HN)    f32
      blk_ref  : (HN, HC)     f32      b_ref    : (1, HC)    f32
      adj_ref  : (1, N, N)    int8     o_ref    : (1, N, HC) f32
    """
    # --- hidden projection: ONE wide bf16 MXU matmul for all heads ----------
    hidden = jnp.dot(x_ref[0], wt_ref[...],
                     preferred_element_type=jnp.float32)            # (N, HC)

    # Replicate hidden rows to all heads with a 0/1 selection matmul
    # (tile[h*N+n, n'] = delta(n, n')); avoids any cross-layout reshape.
    hidden_rep = jnp.dot(tile_ref[...], hidden,
                         preferred_element_type=jnp.float32)        # (HN, HC)
    blkmask = blk_ref[...]                                          # (HN, HC)

    # --- attention logits for ALL heads in one (HN, N) matrix ---------------
    # attn1[h*N+n, 0] = <hidden_h[n], a1_h>  (a1_ref is block-scattered, so
    # the elementwise product already zeroes other heads' features).
    attn1 = jnp.sum(hidden_rep * a1_ref[...], axis=-1, keepdims=True)  # (HN,1)
    # attn2[h*N+n, m] = <hidden_h[m], a2_h>  (contract on the feature dim).
    attn2 = jax.lax.dot_general(
        a2_ref[...], hidden,
        dimension_numbers=(((1,), (1,)), ((), ())),
        preferred_element_type=jnp.float32)                         # (HN, N)

    logits = attn1 + attn2                                          # (HN, N)
    # single LeakyReLU over all heads
    logits = jnp.where(logits > 0, logits, alpha * logits)

    # Adjacency mask, hoisted: int8 -> {0,1} f32, replicated to all heads via
    # the same selection matmul, turned into ONE additive 0 / -1e12 mask.
    adj_rep = jnp.dot(tile_ref[...], adj_ref[0].astype(jnp.float32),
                      preferred_element_type=jnp.float32)           # (HN, N)
    logits = logits + jnp.where(adj_rep > 0.5, 0.0, -1.0e12)

    # --- single batched softmax over the neighbor axis ----------------------
    logits = logits - jnp.max(logits, axis=-1, keepdims=True)
    p = jnp.exp(logits)
    denom = jnp.sum(p, axis=-1, keepdims=True)
    # NOTE: approx reciprocal (EUP slot); rows sum to 1 within ~1e-3.
    p = p * pl.reciprocal(denom, approx=True)                       # (HN, N)

    # --- aggregation: block-diagonal matmul, concat output lane-dense -------
    q = jnp.dot(p.astype(jnp.bfloat16), hidden.astype(jnp.bfloat16),
                preferred_element_type=jnp.float32)                 # (HN, HC)
    out = jnp.dot(tilet_ref[...], q * blkmask,
                  preferred_element_type=jnp.float32)               # (N, HC)

    o_ref[0] = jnp.maximum(out + b_ref[...], 0.0)


def gat_forward(x, W, a, bias, adj, *, alpha=0.2):
    """GAT forward (aggregate='concat', eval mode).

    x:    [B, N, Cin]   float32
    W:    [H, Cout, Cin]
    a:    [H, 2, Cout]
    bias: [H, Cout]
    adj:  [B, N, N]     (>0 means edge present)
    returns [B, N, H*Cout]
    """
    B, N, Cin = x.shape
    H, Cout, _ = W.shape
    HC = H * Cout
    HN = H * N
    f32 = jnp.float32

    # ---- static weight / helper-matrix packing (host side, done once) -----
    #   wt_all[i, h*Cout+c] = W[h, c, i]
    wt_all = jnp.transpose(W, (2, 0, 1)).reshape(Cin, HC).astype(jnp.bfloat16)
    eye_h = jnp.eye(H, dtype=f32)

    def _rep_blockdiag(vec_h_c):
        # (H, Cout) -> (HN, HC): row h*N+n has a[h,:] in column block h, else 0
        blk = (vec_h_c.astype(f32)[:, :, None] * eye_h[:, None, :]
               ).reshape(HC, H).T                                   # (H, HC)
        return jnp.repeat(blk, N, axis=0)                           # (HN, HC)

    a1_rep = _rep_blockdiag(a[:, 0, :])                             # (HN, HC)
    a2_rep = _rep_blockdiag(a[:, 1, :])                             # (HN, HC)
    blkmask = jnp.kron(eye_h, jnp.ones((N, Cout), f32))             # (HN, HC)
    tile = jnp.tile(jnp.eye(N, dtype=f32), (H, 1))                  # (HN, N)
    tilet = jnp.tile(jnp.eye(N, dtype=f32), (1, H))                 # (N, HN)
    bias_all = bias.astype(f32).reshape(1, HC)
    adj_i8 = (adj > 0).astype(jnp.int8)                             # 4x less HBM
    x_bf = x.astype(jnp.bfloat16)

    flops = 2 * B * (N * Cin * HC          # projection
                     + HN * N * HC         # hidden replication
                     + HN * HC             # attn1 (mult+reduce)
                     + HN * HC * N         # attn2
                     + HN * N * N          # adjacency replication
                     + HN * N * HC         # P @ hidden
                     + N * HN * HC)        # block-diag collapse
    bytes_accessed = (x_bf.size * 2 + wt_all.size * 2 + a1_rep.size * 4
                      + a2_rep.size * 4 + tile.size * 4 + tilet.size * 4
                      + blkmask.size * 4 + bias_all.size * 4 + adj_i8.size
                      + B * N * HC * 4)

    kernel = functools.partial(_gat_kernel, alpha=alpha)
    return pl.pallas_call(
        kernel,
        out_shape=jax.ShapeDtypeStruct((B, N, HC), jnp.float32),
        grid=(B,),
        in_specs=[
            pl.BlockSpec((1, N, Cin), lambda b: (b, 0, 0)),    # x (bf16)
            pl.BlockSpec((Cin, HC), lambda b: (0, 0)),         # W_all (bf16)
            pl.BlockSpec((HN, HC), lambda b: (0, 0)),          # a1 block-rep
            pl.BlockSpec((HN, HC), lambda b: (0, 0)),          # a2 block-rep
            pl.BlockSpec((HN, N), lambda b: (0, 0)),           # tile  (HN, N)
            pl.BlockSpec((N, HN), lambda b: (0, 0)),           # tileT (N, HN)
            pl.BlockSpec((HN, HC), lambda b: (0, 0)),          # block mask
            pl.BlockSpec((1, HC), lambda b: (0, 0)),           # bias (concat)
            pl.BlockSpec((1, N, N), lambda b: (b, 0, 0)),      # adj (int8)
        ],
        out_specs=pl.BlockSpec((1, N, HC), lambda b: (b, 0, 0)),
        compiler_params=pltpu.CompilerParams(
            dimension_semantics=("parallel",)),
        cost_estimate=pl.CostEstimate(
            flops=flops,
            transcendentals=B * HN * N,
            bytes_accessed=bytes_accessed),
    )(x_bf, wt_all, a1_rep, a2_rep, tile, tilet, blkmask, bias_all, adj_i8)


def gat_reference(x, W, a, bias, adj, *, alpha=0.2):
    """Pure-JAX f32 reference matching the PyTorch forward (eval mode)."""
    hidden = jnp.einsum('bni,hoi->bhno', x, W)                    # [B,H,N,Cout]
    e = jnp.einsum('bhno,hto->bhnt', hidden, a)                   # [B,H,N,2]
    logits = e[..., 0:1] + e[..., 1][:, :, None, :]               # [B,H,N,N]
    logits = jnp.where(logits > 0, logits, alpha * logits)
    logits = logits + jnp.where(adj[:, None] > 0, 0.0, -1.0e12)
    p = jax.nn.softmax(logits, axis=-1)
    out = jnp.einsum('bhnm,bhmo->bhno', p, hidden) + bias[None, :, None, :]
    out = jnp.transpose(out, (0, 2, 1, 3)).reshape(x.shape[0], x.shape[1], -1)
    return jnp.maximum(out, 0.0)


if __name__ == "__main__":
    B, N, Cin, Cout, H = 2, 16, 8, 16, 8
    alpha = 0.2

    key = jax.random.PRNGKey(0)
    kx, kw, ka, kb, kadj = jax.random.split(key, 5)

    x = jax.random.normal(kx, (B, N, Cin), dtype=jnp.float32)
    W = jax.random.normal(kw, (H, Cout, Cin), dtype=jnp.float32) * 0.1
    a = jax.random.normal(ka, (H, 2, Cout), dtype=jnp.float32) * 0.1
    bias = jax.random.normal(kb, (H, Cout), dtype=jnp.float32) * 0.1

    # deterministic adjacency with guaranteed self-loops
    adj = (jax.random.uniform(kadj, (B, N, N)) > 0.5).astype(jnp.float32)
    adj = jnp.maximum(adj, jnp.eye(N, dtype=jnp.float32)[None])

    out = gat_forward(x, W, a, bias, adj, alpha=alpha)
    out = jax.block_until_ready(out)

    ref = gat_reference(x, W, a, bias, adj, alpha=alpha)
    assert out.shape == (B, N, H * Cout)
    # bf16 MXU inputs + approx EUP reciprocal -> compare at 1e-2 tolerance.
    max_err = float(jnp.max(jnp.abs(out - ref)))
    assert jnp.allclose(out, ref, atol=1e-2, rtol=1e-2), max_err

    print("KERNEL_OK")
</pallas_src>

<mosaic_0001>
module attributes {stable_mosaic.version = 11 : i64} {
  func.func @_gat_kernel(%arg0: i32, %arg1: memref<1x16x8xbf16, #tpu.memory_space<vmem>>, %arg2: memref<8x128xbf16, #tpu.memory_space<vmem>>, %arg3: memref<128x128xf32, #tpu.memory_space<vmem>>, %arg4: memref<128x128xf32, #tpu.memory_space<vmem>>, %arg5: memref<128x16xf32, #tpu.memory_space<vmem>>, %arg6: memref<16x128xf32, #tpu.memory_space<vmem>>, %arg7: memref<128x128xf32, #tpu.memory_space<vmem>>, %arg8: memref<1x128xf32, #tpu.memory_space<vmem>>, %arg9: memref<1x16x16xi8, #tpu.memory_space<vmem>>, %arg10: memref<1x16x128xf32, #tpu.memory_space<vmem>>) attributes {dimension_semantics = [#tpu.dimension_semantics<parallel>], iteration_bounds = array<i64: 2>, scalar_prefetch = 0 : i64, scratch_operands = 0 : i64, tpu.core_type = #tpu.core_type<tc>, window_params = [{transform_indices = @transform_0, window_bounds = array<i64: 1, 16, 8>}, {pipeline_mode = #tpu.pipeline_mode<synchronous>, transform_indices = @transform_1, window_bounds = array<i64: 8, 128>}, {pipeline_mode = #tpu.pipeline_mode<synchronous>, transform_indices = @transform_2, window_bounds = array<i64: 128, 128>}, {pipeline_mode = #tpu.pipeline_mode<synchronous>, transform_indices = @transform_3, window_bounds = array<i64: 128, 128>}, {pipeline_mode = #tpu.pipeline_mode<synchronous>, transform_indices = @transform_4, window_bounds = array<i64: 128, 16>}, {pipeline_mode = #tpu.pipeline_mode<synchronous>, transform_indices = @transform_5, window_bounds = array<i64: 16, 128>}, {pipeline_mode = #tpu.pipeline_mode<synchronous>, transform_indices = @transform_6, window_bounds = array<i64: 128, 128>}, {pipeline_mode = #tpu.pipeline_mode<synchronous>, transform_indices = @transform_7, window_bounds = array<i64: 1, 128>}, {transform_indices = @transform_8, window_bounds = array<i64: 1, 16, 16>}, {transform_indices = @transform_9, window_bounds = array<i64: 1, 16, 128>}]} {
    %c0 = arith.constant 0 : index
    %c0_0 = arith.constant 0 : index
    %c0_1 = arith.constant 0 : index
    %0 = vector.load %arg1[%c0, %c0_0, %c0_1] : memref<1x16x8xbf16, #tpu.memory_space<vmem>>, vector<1x16x8xbf16>
    %1 = vector.shape_cast %0 : vector<1x16x8xbf16> to vector<16x8xbf16>
    %c0_2 = arith.constant 0 : index
    %c0_3 = arith.constant 0 : index
    %2 = vector.load %arg2[%c0_2, %c0_3] : memref<8x128xbf16, #tpu.memory_space<vmem>>, vector<8x128xbf16>
    %cst = arith.constant dense<0.000000e+00> : vector<16x128xf32>
    %3 = tpu.matmul %1, %2, %cst {dimension_numbers = #tpu.dot_dimension_numbers<[1], [0], [0], [1], [0, 0, 1, 1], [], []>} : vector<16x8xbf16>, vector<8x128xbf16>, vector<16x128xf32> -> vector<16x128xf32>
    %c0_4 = arith.constant 0 : index
    %c0_5 = arith.constant 0 : index
    %4 = vector.load %arg5[%c0_4, %c0_5] : memref<128x16xf32, #tpu.memory_space<vmem>>, vector<128x16xf32>
    %cst_6 = arith.constant dense<0.000000e+00> : vector<128x128xf32>
    %5 = tpu.matmul %4, %3, %cst_6 {dimension_numbers = #tpu.dot_dimension_numbers<[1], [0], [0], [1], [0, 0, 1, 1], [], []>} : vector<128x16xf32>, vector<16x128xf32>, vector<128x128xf32> -> vector<128x128xf32>
    %c0_7 = arith.constant 0 : index
    %c0_8 = arith.constant 0 : index
    %6 = vector.load %arg7[%c0_7, %c0_8] : memref<128x128xf32, #tpu.memory_space<vmem>>, vector<128x128xf32>
    %c0_9 = arith.constant 0 : index
    %c0_10 = arith.constant 0 : index
    %7 = vector.load %arg3[%c0_9, %c0_10] : memref<128x128xf32, #tpu.memory_space<vmem>>, vector<128x128xf32>
    %8 = arith.mulf %5, %7 : vector<128x128xf32>
    %cst_11 = arith.constant dense<0.000000e+00> : vector<128xf32>
    %9 = vector.multi_reduction <add>, %8, %cst_11 [1] : vector<128x128xf32> to vector<128xf32>
    %10 = vector.shape_cast %9 : vector<128xf32> to vector<128x1xf32>
    %c0_12 = arith.constant 0 : index
    %c0_13 = arith.constant 0 : index
    %11 = vector.load %arg4[%c0_12, %c0_13] : memref<128x128xf32, #tpu.memory_space<vmem>>, vector<128x128xf32>
    %cst_14 = arith.constant dense<0.000000e+00> : vector<128x16xf32>
    %12 = tpu.matmul %11, %3, %cst_14 {dimension_numbers = #tpu.dot_dimension_numbers<[1], [1], [0], [0], [0, 0, 1, 0], [], []>} : vector<128x128xf32>, vector<16x128xf32>, vector<128x16xf32> -> vector<128x16xf32>
    %13 = vector.broadcast %10 : vector<128x1xf32> to vector<128x16xf32>
    %14 = arith.addf %13, %12 : vector<128x16xf32>
    %cst_15 = arith.constant 0.000000e+00 : f32
    %15 = vector.broadcast %cst_15 : f32 to vector<128x16xf32>
    %16 = arith.cmpf ogt, %14, %15 : vector<128x16xf32>
    %cst_16 = arith.constant 2.000000e-01 : f32
    %17 = vector.broadcast %cst_16 : f32 to vector<128x16xf32>
    %18 = arith.mulf %17, %14 : vector<128x16xf32>
    %19 = arith.select %16, %14, %18 : vector<128x16xi1>, vector<128x16xf32>
    %c0_17 = arith.constant 0 : index
    %c0_18 = arith.constant 0 : index
    %20 = vector.load %arg5[%c0_17, %c0_18] : memref<128x16xf32, #tpu.memory_space<vmem>>, vector<128x16xf32>
    %c0_19 = arith.constant 0 : index
    %c0_20 = arith.constant 0 : index
    %c0_21 = arith.constant 0 : index
    %21 = vector.load %arg9[%c0_19, %c0_20, %c0_21] : memref<1x16x16xi8, #tpu.memory_space<vmem>>, vector<1x16x16xi8>
    %22 = vector.shape_cast %21 : vector<1x16x16xi8> to vector<16x16xi8>
    %23 = arith.sitofp %22 : vector<16x16xi8> to vector<16x16xf32>
    %cst_22 = arith.constant dense<0.000000e+00> : vector<128x16xf32>
    %24 = tpu.matmul %20, %23, %cst_22 {dimension_numbers = #tpu.dot_dimension_numbers<[1], [0], [0], [1], [0, 0, 1, 1], [], []>} : vector<128x16xf32>, vector<16x16xf32>, vector<128x16xf32> -> vector<128x16xf32>
    %cst_23 = arith.constant 5.000000e-01 : f32
    %25 = vector.broadcast %cst_23 : f32 to vector<128x16xf32>
    %26 = arith.cmpf ogt, %24, %25 : vector<128x16xf32>
    %cst_24 = arith.constant 0.000000e+00 : f32
    %cst_25 = arith.constant -9.99999995E+11 : f32
    %27 = vector.broadcast %cst_24 : f32 to vector<128x16xf32>
    %28 = vector.broadcast %cst_25 : f32 to vector<128x16xf32>
    %29 = arith.select %26, %27, %28 : vector<128x16xi1>, vector<128x16xf32>
    %30 = arith.addf %19, %29 : vector<128x16xf32>
    %cst_26 = arith.constant dense<0xFF800000> : vector<128xf32>
    %31 = vector.multi_reduction <maximumf>, %30, %cst_26 [1] : vector<128x16xf32> to vector<128xf32>
    %32 = vector.shape_cast %31 : vector<128xf32> to vector<128x1xf32>
    %33 = vector.broadcast %32 : vector<128x1xf32> to vector<128x16xf32>
    %34 = arith.subf %30, %33 : vector<128x16xf32>
    %35 = math.exp %34 : vector<128x16xf32>
    %cst_27 = arith.constant dense<0.000000e+00> : vector<128xf32>
    %36 = vector.multi_reduction <add>, %35, %cst_27 [1] : vector<128x16xf32> to vector<128xf32>
    %37 = vector.shape_cast %36 : vector<128xf32> to vector<128x1xf32>
    %38 = tpu.reciprocal %37 {approx = true} : vector<128x1xf32> -> vector<128x1xf32>
    %39 = vector.broadcast %38 : vector<128x1xf32> to vector<128x16xf32>
    %40 = arith.mulf %35, %39 : vector<128x16xf32>
    %41 = arith.truncf %40 : vector<128x16xf32> to vector<128x16xbf16>
    %42 = arith.truncf %3 : vector<16x128xf32> to vector<16x128xbf16>
    %cst_28 = arith.constant dense<0.000000e+00> : vector<128x128xf32>
    %43 = tpu.matmul %41, %42, %cst_28 {dimension_numbers = #tpu.dot_dimension_numbers<[1], [0], [0], [1], [0, 0, 1, 1], [], []>} : vector<128x16xbf16>, vector<16x128xbf16>, vector<128x128xf32> -> vector<128x128xf32>
    %c0_29 = arith.constant 0 : index
    %c0_30 = arith.constant 0 : index
    %44 = vector.load %arg6[%c0_29, %c0_30] : memref<16x128xf32, #tpu.memory_space<vmem>>, vector<16x128xf32>
    %45 = arith.mulf %43, %6 : vector<128x128xf32>
    %cst_31 = arith.constant dense<0.000000e+00> : vector<16x128xf32>
    %46 = tpu.matmul %44, %45, %cst_31 {dimension_numbers = #tpu.dot_dimension_numbers<[1], [0], [0], [1], [0, 0, 1, 1], [], []>} : vector<16x128xf32>, vector<128x128xf32>, vector<16x128xf32> -> vector<16x128xf32>
    %c0_32 = arith.constant 0 : index
    %c0_33 = arith.constant 0 : index
    %47 = vector.load %arg8[%c0_32, %c0_33] : memref<1x128xf32, #tpu.memory_space<vmem>>, vector<1x128xf32>
    %48 = vector.broadcast %47 : vector<1x128xf32> to vector<16x128xf32>
    %49 = arith.addf %46, %48 : vector<16x128xf32>
    %cst_34 = arith.constant 0.000000e+00 : f32
    %50 = vector.broadcast %cst_34 : f32 to vector<16x128xf32>
    %51 = arith.maximumf %49, %50 : vector<16x128xf32>
    %c0_35 = arith.constant 0 : index
    %c0_36 = arith.constant 0 : index
    %c0_37 = arith.constant 0 : index
    %52 = vector.load %arg10[%c0_35, %c0_36, %c0_37] : memref<1x16x128xf32, #tpu.memory_space<vmem>>, vector<1x16x128xf32>
    %53 = vector.shape_cast %52 : vector<1x16x128xf32> to vector<16x128xf32>
    %54 = vector.shape_cast %51 : vector<16x128xf32> to vector<1x16x128xf32>
    tpu.vector_store %arg10[%c0_35, %c0_36, %c0_37], %54 {strides = array<i32>} : memref<1x16x128xf32, #tpu.memory_space<vmem>>, vector<1x16x128xf32>,
    return
  }
  func.func @transform_0(%arg0: i32) -> (i32, i32, i32) {
    %c0_i32 = arith.constant 0 : i32
    %c0_i32_0 = arith.constant 0 : i32
    %c0_i32_1 = arith.constant 0 : i32
    return %arg0, %c0_i32, %c0_i32_0 : i32, i32, i32
  }
  func.func @transform_1(%arg0: i32) -> (i32, i32) {
    %c0_i32 = arith.constant 0 : i32
    %c0_i32_0 = arith.constant 0 : i32
    %c0_i32_1 = arith.constant 0 : i32
    return %c0_i32, %c0_i32_0 : i32, i32
  }
  func.func @transform_2(%arg0: i32) -> (i32, i32) {
    %c0_i32 = arith.constant 0 : i32
    %c0_i32_0 = arith.constant 0 : i32
    %c0_i32_1 = arith.constant 0 : i32
    return %c0_i32, %c0_i32_0 : i32, i32
  }
  func.func @transform_3(%arg0: i32) -> (i32, i32) {
    %c0_i32 = arith.constant 0 : i32
    %c0_i32_0 = arith.constant 0 : i32
    %c0_i32_1 = arith.constant 0 : i32
    return %c0_i32, %c0_i32_0 : i32, i32
  }
  func.func @transform_4(%arg0: i32) -> (i32, i32) {
    %c0_i32 = arith.constant 0 : i32
    %c0_i32_0 = arith.constant 0 : i32
    %c0_i32_1 = arith.constant 0 : i32
    return %c0_i32, %c0_i32_0 : i32, i32
  }
  func.func @transform_5(%arg0: i32) -> (i32, i32) {
    %c0_i32 = arith.constant 0 : i32
    %c0_i32_0 = arith.constant 0 : i32
    %c0_i32_1 = arith.constant 0 : i32
    return %c0_i32, %c0_i32_0 : i32, i32
  }
  func.func @transform_6(%arg0: i32) -> (i32, i32) {
    %c0_i32 = arith.constant 0 : i32
    %c0_i32_0 = arith.constant 0 : i32
    %c0_i32_1 = arith.constant 0 : i32
    return %c0_i32, %c0_i32_0 : i32, i32
  }
  func.func @transform_7(%arg0: i32) -> (i32, i32) {
    %c0_i32 = arith.constant 0 : i32
    %c0_i32_0 = arith.constant 0 : i32
    %c0_i32_1 = arith.constant 0 : i32
    return %c0_i32, %c0_i32_0 : i32, i32
  }
  func.func @transform_8(%arg0: i32) -> (i32, i32, i32) {
    %c0_i32 = arith.constant 0 : i32
    %c0_i32_0 = arith.constant 0 : i32
    %c0_i32_1 = arith.constant 0 : i32
    return %arg0, %c0_i32, %c0_i32_0 : i32, i32, i32
  }
  func.func @transform_9(%arg0: i32) -> (i32, i32, i32) {
    %c0_i32 = arith.constant 0 : i32
    %c0_i32_0 = arith.constant 0 : i32
    %c0_i32_1 = arith.constant 0 : i32
    return %arg0, %c0_i32, %c0_i32_0 : i32, i32, i32
  }
}

</mosaic_0001>

<llo_original>
// kernel: tpu_custom_call.1
$region0: #{tpu_custom_call.1}
  #allocation0 [shape = 'u32[]', space=smem, size = 0x4, offset = 0x4, fixed_abs, tag = 'smem constant byte address 0x4 - core index']
  #allocation1 [shape = 'u32[144,128]{1,0:T(1,128)}', space=vmem, size = 0x12000, scoped, tag = 'internal scratch']
  %s0 = inlined_call_operand.vmem [shape: bf16[2,16,8], index: 0, kind: input, shape index: {}]
  %s1 = inlined_call_operand.vmem [shape: bf16[8,128], index: 1, kind: input, shape index: {}]
  %s2 = inlined_call_operand.vmem [shape: f32[128,128], index: 2, kind: input, shape index: {}]
  %s3 = inlined_call_operand.hbm [shape: f32[128,128], index: 3, kind: input, shape index: {}]
  %s4 = inlined_call_operand.vmem [shape: f32[128,16], index: 4, kind: input, shape index: {}]
  %s5 = inlined_call_operand.vmem [shape: f32[16,128], index: 5, kind: input, shape index: {}]
  %s6 = inlined_call_operand.hbm [shape: f32[128,128], index: 6, kind: input, shape index: {}]
  %s7 = inlined_call_operand.vmem [shape: f32[1,128], index: 7, kind: input, shape index: {}]
  %s8 = inlined_call_operand.vmem [shape: s8[2,16,16], index: 8, kind: input, shape index: {}]
  %s9 = inlined_call_operand.hbm [shape: f32[2,16,128], index: 9, kind: output, shape index: {}]
  %s10 = sld [smem:[#allocation0]]
  $region77: #{tpu_custom_call.1} parent=0
    _
  %s12 = ssub.s32 1, %s10
  %s13 = scalar_select 0, %s12, %s10
  $region1: #{tpu_custom_call.1} parent=0
    #allocation2 [shape = 'u8[65536]{0}', space=vmem, size = 0x10000, scoped, tag = 'input window, operand 3, single buffered']
    #allocation3 [shape = 's32[2]{0}', space=sflag, size = 0x8, scoped, tag = 'scoped memory for tpu_custom_call.1']
    #allocation4 [shape = 's32[2]{0}', space=sflag, size = 0x8, scoped, tag = 'scoped memory for tpu_custom_call.1']
    #allocation5 [shape = 'u8[65536]{0}', space=vmem, size = 0x10000, scoped, tag = 'input window, operand 6, single buffered']
    #allocation6 [shape = 's32[1]{0}', space=sflag, size = 0x4, scoped, tag = 'scoped memory for tpu_custom_call.1']
    #allocation7 [shape = 'u8[16384]{0}', space=vmem, size = 0x4000, scoped, tag = 'output window, operand 0']
    %14 = vsyncpa [#allocation3], 0
    %15 = vsyncpa [#allocation6], 0
    %16 = vsyncpa [#allocation4], 0
    %s17 = scalar_lea.sflag [#allocation4], 1
    %18 = vsyncpa %s17, 0
    loop: start=0, step=1, limit=4
    $region2: #{tpu_custom_call.1} parent=1 // loop_pre_header
      _
    $region3: #{tpu_custom_call.1} parent=1 // loop_header
      %s20 = sphi 0, %s24
      %p21 = scmp.ge.s32.totalorder %s20, 4
      %s30 = sphi 0, %s32
      %s33 = sphi 0, %s30
      %s34 = sphi 0, %s33
      %s50 = sphi 0, %s34
      %s54 = sphi 0, %s54
      %s56 = sphi 0, %s54
      %s57 = sphi 0, %s56
      %s71 = sphi 0, %s57
      %s75 = sphi 0, %s75
      %s77 = sphi 0, %s75
      %s78 = sphi 0, %s77
      %s92 = sphi 0, %s78
      %s96 = sphi 0, %s96
      %s98 = sphi 0, %s96
      %s99 = sphi 0, %s98
      %s113 = sphi 0, %s99
      %s117 = sphi 0, %s117
      %s119 = sphi 0, %s117
      %s120 = sphi 0, %s119
      %s134 = sphi 0, %s120
      %s138 = sphi 0, %s138
      %s140 = sphi 0, %s138
      %s141 = sphi 0, %s140
      %s155 = sphi 0, %s141
      %s159 = sphi 0, %s159
      %s161 = sphi 0, %s159
      %s162 = sphi 0, %s161
      %s176 = sphi 0, %s162
      %s180 = sphi 0, %s180
      %s182 = sphi 0, %s180
      %s183 = sphi 0, %s182
      %s197 = sphi 0, %s183
      %s203 = sphi 0, %s205
      %s206 = sphi 0, %s203
      %s207 = sphi 0, %s206
      %s223 = sphi 0, %s207
      %s229 = sphi 0, %s231
      %s232 = sphi 0, %s229
      %s233 = sphi 0, %s232
      %s249 = sphi 0, %s233
    $region4: #{tpu_custom_call.1} parent=1 // loop_header_branch
      %23 = sbr.rel (%p21) target = $region8
    $region5: #{tpu_custom_call.1} parent=1 // loop_body
      %s25 = ssub.s32 %s20, 1
      %s26 = ssub.s32 %s20, 2
      %s27 = sadd.s32 %s20, 1
      %s28 = ssub.s32 %s20, %s27
      %p29 = scmp.eq.s32.totalorder %s28, 0
      %s31 = sadd.s32 %s30, 1
      %s32 = scalar_select %p29, %s30, %s31
      %p35 = pneg %p29
      %p36 = scmp.eq.s32.totalorder %s20, 1
      %p37 = por %p35, %p36
      %p38 = scmp.ne.s32.totalorder %s30, %s33
      %p39 = scmp.eq.s32.totalorder %s20, 0
      %p40 = por %p38, %p39
      %p41 = scmp.ne.s32.totalorder %s30, %s33
      %p42 = scmp.eq.s32.totalorder %s25, 1
      %p43 = por %p41, %p42
      %p44 = scmp.ne.s32.totalorder %s33, %s34
      %p45 = scmp.eq.s32.totalorder %s25, 0
      %p46 = por %p44, %p45
      %p47 = scmp.ne.s32.totalorder %s33, %s34
      %p48 = scmp.eq.s32.totalorder %s26, 1
      %p49 = por %p47, %p48
      %p51 = scmp.ne.s32.totalorder %s34, %s50
      %p52 = scmp.eq.s32.totalorder %s26, 0
      %p53 = por %p51, %p52
      %s55 = sadd.s32 %s54, 1
      %p58 = scmp.eq.s32.totalorder %s20, 1
      %p59 = scmp.ne.s32.totalorder %s54, %s56
      %p60 = scmp.eq.s32.totalorder %s20, 0
      %p61 = por %p59, %p60
      %p62 = scmp.ne.s32.totalorder %s54, %s56
      %p63 = scmp.eq.s32.totalorder %s25, 1
      %p64 = por %p62, %p63
      %p65 = scmp.ne.s32.totalorder %s56, %s57
      %p66 = scmp.eq.s32.totalorder %s25, 0
      %p67 = por %p65, %p66
      %p68 = scmp.ne.s32.totalorder %s56, %s57
      %p69 = scmp.eq.s32.totalorder %s26, 1
      %p70 = por %p68, %p69
      %p72 = scmp.ne.s32.totalorder %s57, %s71
      %p73 = scmp.eq.s32.totalorder %s26, 0
      %p74 = por %p72, %p73
      %s76 = sadd.s32 %s75, 1
      %p79 = scmp.eq.s32.totalorder %s20, 1
      %p80 = scmp.ne.s32.totalorder %s75, %s77
      %p81 = scmp.eq.s32.totalorder %s20, 0
      %p82 = por %p80, %p81
      %p83 = scmp.ne.s32.totalorder %s75, %s77
      %p84 = scmp.eq.s32.totalorder %s25, 1
      %p85 = por %p83, %p84
      %p86 = scmp.ne.s32.totalorder %s77, %s78
      %p87 = scmp.eq.s32.totalorder %s25, 0
      %p88 = por %p86, %p87
      %p89 = scmp.ne.s32.totalorder %s77, %s78
      %p90 = scmp.eq.s32.totalorder %s26, 1
      %p91 = por %p89, %p90
      %p93 = scmp.ne.s32.totalorder %s78, %s92
      %p94 = scmp.eq.s32.totalorder %s26, 0
      %p95 = por %p93, %p94
      %s97 = sadd.s32 %s96, 1
      %p100 = scmp.eq.s32.totalorder %s20, 1
      %p101 = scmp.ne.s32.totalorder %s96, %s98
      %p102 = scmp.eq.s32.totalorder %s20, 0
      %p103 = por %p101, %p102
      %p104 = scmp.ne.s32.totalorder %s96, %s98
      %p105 = scmp.eq.s32.totalorder %s25, 1
      %p106 = por %p104, %p105
      %p107 = scmp.ne.s32.totalorder %s98, %s99
      %p108 = scmp.eq.s32.totalorder %s25, 0
      %p109 = por %p107, %p108
      %p110 = scmp.ne.s32.totalorder %s98, %s99
      %p111 = scmp.eq.s32.totalorder %s26, 1
      %p112 = por %p110, %p111
      %p114 = scmp.ne.s32.totalorder %s99, %s113
      %p115 = scmp.eq.s32.totalorder %s26, 0
      %p116 = por %p114, %p115
      %s118 = sadd.s32 %s117, 1
      %p121 = scmp.eq.s32.totalorder %s20, 1
      %p122 = scmp.ne.s32.totalorder %s117, %s119
      %p123 = scmp.eq.s32.totalorder %s20, 0
      %p124 = por %p122, %p123
      %p125 = scmp.ne.s32.totalorder %s117, %s119
      %p126 = scmp.eq.s32.totalorder %s25, 1
      %p127 = por %p125, %p126
      %p128 = scmp.ne.s32.totalorder %s119, %s120
      %p129 = scmp.eq.s32.totalorder %s25, 0
      %p130 = por %p128, %p129
      %p131 = scmp.ne.s32.totalorder %s119, %s120
      %p132 = scmp.eq.s32.totalorder %s26, 1
      %p133 = por %p131, %p132
      %p135 = scmp.ne.s32.totalorder %s120, %s134
      %p136 = scmp.eq.s32.totalorder %s26, 0
      %p137 = por %p135, %p136
      %s139 = sadd.s32 %s138, 1
      %p142 = scmp.eq.s32.totalorder %s20, 1
      %p143 = scmp.ne.s32.totalorder %s138, %s140
      %p144 = scmp.eq.s32.totalorder %s20, 0
      %p145 = por %p143, %p144
      %p146 = scmp.ne.s32.totalorder %s138, %s140
      %p147 = scmp.eq.s32.totalorder %s25, 1
      %p148 = por %p146, %p147
      %p149 = scmp.ne.s32.totalorder %s140, %s141
      %p150 = scmp.eq.s32.totalorder %s25, 0
      %p151 = por %p149, %p150
      %p152 = scmp.ne.s32.totalorder %s140, %s141
      %p153 = scmp.eq.s32.totalorder %s26, 1
      %p154 = por %p152, %p153
      %p156 = scmp.ne.s32.totalorder %s141, %s155
      %p157 = scmp.eq.s32.totalorder %s26, 0
      %p158 = por %p156, %p157
      %s160 = sadd.s32 %s159, 1
      %p163 = scmp.eq.s32.totalorder %s20, 1
      %p164 = scmp.ne.s32.totalorder %s159, %s161
      %p165 = scmp.eq.s32.totalorder %s20, 0
      %p166 = por %p164, %p165
      %p167 = scmp.ne.s32.totalorder %s159, %s161
      %p168 = scmp.eq.s32.totalorder %s25, 1
      %p169 = por %p167, %p168
      %p170 = scmp.ne.s32.totalorder %s161, %s162
      %p171 = scmp.eq.s32.totalorder %s25, 0
      %p172 = por %p170, %p171
      %p173 = scmp.ne.s32.totalorder %s161, %s162
      %p174 = scmp.eq.s32.totalorder %s26, 1
      %p175 = por %p173, %p174
      %p177 = scmp.ne.s32.totalorder %s162, %s176
      %p178 = scmp.eq.s32.totalorder %s26, 0
      %p179 = por %p177, %p178
      %s181 = sadd.s32 %s180, 1
      %p184 = scmp.eq.s32.totalorder %s20, 1
      %p185 = scmp.ne.s32.totalorder %s180, %s182
      %p186 = scmp.eq.s32.totalorder %s20, 0
      %p187 = por %p185, %p186
      %p188 = scmp.ne.s32.totalorder %s180, %s182
      %p189 = scmp.eq.s32.totalorder %s25, 1
      %p190 = por %p188, %p189
      %p191 = scmp.ne.s32.totalorder %s182, %s183
      %p192 = scmp.eq.s32.totalorder %s25, 0
      %p193 = por %p191, %p192
      %p194 = scmp.ne.s32.totalorder %s182, %s183
      %p195 = scmp.eq.s32.totalorder %s26, 1
      %p196 = por %p194, %p195
      %p198 = scmp.ne.s32.totalorder %s183, %s197
      %p199 = scmp.eq.s32.totalorder %s26, 0
      %p200 = por %p198, %p199
      %s201 = ssub.s32 %s20, %s27
      %p202 = scmp.eq.s32.totalorder %s201, 0
      %s204 = sadd.s32 %s203, 1
      %s205 = scalar_select %p202, %s203, %s204
      %p208 = pneg %p202
      %p209 = scmp.eq.s32.totalorder %s20, 1
      %p210 = por %p208, %p209
      %p211 = scmp.ne.s32.totalorder %s203, %s206
      %p212 = scmp.eq.s32.totalorder %s20, 0
      %p213 = por %p211, %p212
      %p214 = scmp.ne.s32.totalorder %s203, %s206
      %p215 = scmp.eq.s32.totalorder %s25, 1
      %p216 = por %p214, %p215
      %p217 = scmp.ne.s32.totalorder %s206, %s207
      %p218 = scmp.eq.s32.totalorder %s25, 0
      %p219 = por %p217, %p218
      %p220 = scmp.ne.s32.totalorder %s206, %s207
      %p221 = scmp.eq.s32.totalorder %s26, 1
      %p222 = por %p220, %p221
      %p224 = scmp.ne.s32.totalorder %s207, %s223
      %p225 = scmp.eq.s32.totalorder %s26, 0
      %p226 = por %p224, %p225
      %s227 = ssub.s32 %s20, %s27
      %p228 = scmp.eq.s32.totalorder %s227, 0
      %s230 = sadd.s32 %s229, 1
      %s231 = scalar_select %p228, %s229, %s230
      %p234 = pneg %p228
      %p235 = scmp.eq.s32.totalorder %s20, 1
      %p236 = por %p234, %p235
      %p237 = scmp.ne.s32.totalorder %s229, %s232
      %p238 = scmp.eq.s32.totalorder %s20, 0
      %p239 = por %p237, %p238
      %p240 = scmp.ne.s32.totalorder %s229, %s232
      %p241 = scmp.eq.s32.totalorder %s25, 1
      %p242 = por %p240, %p241
      %p243 = scmp.ne.s32.totalorder %s232, %s233
      %p244 = scmp.eq.s32.totalorder %s25, 0
      %p245 = por %p243, %p244
      %p246 = scmp.ne.s32.totalorder %s232, %s233
      %p247 = scmp.eq.s32.totalorder %s26, 1
      %p248 = por %p246, %p247
      %p250 = scmp.ne.s32.totalorder %s233, %s249
      %p251 = scmp.eq.s32.totalorder %s26, 0
      %p252 = por %p250, %p251
      %p253 = scmp.le.s32.totalorder 1, %s20
      %p254 = scmp.lt.s32.totalorder %s20, 3
      %p255 = pnand %p253, %p254
      %p256 = pneg %p255
      // Predicated region
      $region9: #{tpu_custom_call.1} parent=5 // pred_check
        _
      $region10: #{tpu_custom_call.1} parent=5 // pred_check_branch
        %258 = sbr.rel (%p255) target = $region12
      $region11: #{tpu_custom_call.1} parent=5 // pred_region
        %s259 = ssub.s32 %s20, 1
        // Predicated region
        $region13: #{tpu_custom_call.1} parent=11 // pred_check
          %p260 = pneg %p67
        $region14: #{tpu_custom_call.1} parent=11 // pred_check_branch
          %262 = sbr.rel (%p260) target = $region16
        $region15: #{tpu_custom_call.1} parent=11 // pred_region
          _
        $region16: #{tpu_custom_call.1} parent=11 // pred_fallthru
          _
        // Predicated region
        $region17: #{tpu_custom_call.1} parent=11 // pred_check
          %p263 = pneg %p88
        $region18: #{tpu_custom_call.1} parent=11 // pred_check_branch
          %265 = sbr.rel (%p263) target = $region20
        $region19: #{tpu_custom_call.1} parent=11 // pred_region
          _
        $region20: #{tpu_custom_call.1} parent=11 // pred_fallthru
          _
        // Predicated region
        $region21: #{tpu_custom_call.1} parent=11 // pred_check
          %p266 = pneg %p109
        $region22: #{tpu_custom_call.1} parent=11 // pred_check_branch
          %268 = sbr.rel (%p266) target = $region24
        $region23: #{tpu_custom_call.1} parent=11 // pred_region
          %s270 = ssub.s32 2048, 2048
          %271 = vsyncadd [#allocation3], %s270
          %s272 = sshll.u32 [#allocation2], 4
          %s273 = int_to_ptr.vmem [resolvable:$true] %s272
          %278 = dma.hbm_to_vmem [thread:$0]  %s3, 2048, %s273, [#allocation3], 128, 128, 8
        $region24: #{tpu_custom_call.1} parent=11 // pred_fallthru
          _
        // Predicated region
        $region25: #{tpu_custom_call.1} parent=11 // pred_check
          %p279 = pneg %p130
        $region26: #{tpu_custom_call.1} parent=11 // pred_check_branch
          %281 = sbr.rel (%p279) target = $region28
        $region27: #{tpu_custom_call.1} parent=11 // pred_region
          _
        $region28: #{tpu_custom_call.1} parent=11 // pred_fallthru
          _
        // Predicated region
        $region29: #{tpu_custom_call.1} parent=11 // pred_check
          %p282 = pneg %p151
        $region30: #{tpu_custom_call.1} parent=11 // pred_check_branch
          %284 = sbr.rel (%p282) target = $region32
        $region31: #{tpu_custom_call.1} parent=11 // pred_region
          _
        $region32: #{tpu_custom_call.1} parent=11 // pred_fallthru
          _
        // Predicated region
        $region33: #{tpu_custom_call.1} parent=11 // pred_check
          %p285 = pneg %p172
        $region34: #{tpu_custom_call.1} parent=11 // pred_check_branch
          %287 = sbr.rel (%p285) target = $region36
        $region35: #{tpu_custom_call.1} parent=11 // pred_region
          %s289 = ssub.s32 2048, 2048
          %290 = vsyncadd [#allocation6], %s289
          %s291 = sshll.u32 [#allocation5], 4
          %s292 = int_to_ptr.vmem [resolvable:$true] %s291
          %297 = dma.hbm_to_vmem [thread:$0]  %s6, 2048, %s292, [#allocation6], 128, 128, 8
        $region36: #{tpu_custom_call.1} parent=11 // pred_fallthru
          _
        // Predicated region
        $region37: #{tpu_custom_call.1} parent=11 // pred_check
          %p298 = pneg %p193
        $region38: #{tpu_custom_call.1} parent=11 // pred_check_branch
          %300 = sbr.rel (%p298) target = $region40
        $region39: #{tpu_custom_call.1} parent=11 // pred_region
          _
        $region40: #{tpu_custom_call.1} parent=11 // pred_fallthru
          _
      $region12: #{tpu_custom_call.1} parent=5 // pred_fallthru
        _
      %p301 = scmp.lt.s32.totalorder %s20, 2
      // Predicated region
      $region41: #{tpu_custom_call.1} parent=5 // pred_check
        %p302 = pneg %p301
      $region42: #{tpu_custom_call.1} parent=5 // pred_check_branch
        %304 = sbr.rel (%p302) target = $region44
      $region43: #{tpu_custom_call.1} parent=5 // pred_region
        // Predicated region
        $region45: #{tpu_custom_call.1} parent=43 // pred_check
          %p305 = pneg %p40
        $region46: #{tpu_custom_call.1} parent=43 // pred_check_branch
          %307 = sbr.rel (%p305) target = $region48
        $region47: #{tpu_custom_call.1} parent=43 // pred_region
          %p308 = scmp.lt.s32.totalorder %s20, 1
          %s309 = scalar_select %p308, %s20, 1
          %s310 = smul.addr %s309, 2
          %s311 = smul.addr %s310, 4
          %s312 = scalar_lea.vmem %s0, %s311
        $region48: #{tpu_custom_call.1} parent=43 // pred_fallthru
          _
        // Predicated region
        $region49: #{tpu_custom_call.1} parent=43 // pred_check
          %p313 = pneg %p213
        $region50: #{tpu_custom_call.1} parent=43 // pred_check_branch
          %315 = sbr.rel (%p313) target = $region52
        $region51: #{tpu_custom_call.1} parent=43 // pred_region
          %p316 = scmp.lt.s32.totalorder %s20, 1
          %s317 = scalar_select %p316, %s20, 1
          %s318 = smul.addr %s317, 2
          %s319 = smul.addr %s318, 2
          %s320 = scalar_lea.vmem %s8, %s319
        $region52: #{tpu_custom_call.1} parent=43 // pred_fallthru
          _
      $region44: #{tpu_custom_call.1} parent=5 // pred_fallthru
        _
      %p321 = scmp.le.s32.totalorder 1, %s20
      %p322 = scmp.lt.s32.totalorder %s20, 3
      %p323 = pnand %p321, %p322
      %p324 = pneg %p323
      // Predicated region
      $region53: #{tpu_custom_call.1} parent=5 // pred_check
        _
      $region54: #{tpu_custom_call.1} parent=5 // pred_check_branch
        %326 = sbr.rel (%p323) target = $region56
      $region55: #{tpu_custom_call.1} parent=5 // pred_region
        %s327 = ssub.s32 %s20, 1
        // Predicated region
        $region57: #{tpu_custom_call.1} parent=55 // pred_check
          %p328 = pneg %p109
        $region58: #{tpu_custom_call.1} parent=55 // pred_check_branch
          %330 = sbr.rel (%p328) target = $region60
        $region59: #{tpu_custom_call.1} parent=55 // pred_region
          %331 = dma.done [#allocation3], 2048
        $region60: #{tpu_custom_call.1} parent=55 // pred_fallthru
          _
        // Predicated region
        $region61: #{tpu_custom_call.1} parent=55 // pred_check
          %p332 = pneg %p172
        $region62: #{tpu_custom_call.1} parent=55 // pred_check_branch
          %334 = sbr.rel (%p332) target = $region64
        $region63: #{tpu_custom_call.1} parent=55 // pred_region
          %335 = dma.done [#allocation6], 2048
        $region64: #{tpu_custom_call.1} parent=55 // pred_fallthru
          _
        %p336 = scmp.lt.s32.totalorder %s25, 1
        %s337 = scalar_select %p336, %s25, 1
        %s338 = smul.addr %s337, 2
        %s339 = smul.addr %s338, 4
        %s340 = scalar_lea.vmem %s0, %s339
        %p341 = pneg %p46
        %p342 = pneg %p43
        %p343 = pneg %p67
        %p344 = pneg %p64
        %p345 = pneg %p88
        %p346 = pneg %p85
        %p347 = pneg %p109
        %p348 = pneg %p106
        %p349 = pneg %p130
        %p350 = pneg %p127
        %p351 = pneg %p151
        %p352 = pneg %p148
        %p353 = pneg %p172
        %p354 = pneg %p169
        %p355 = pneg %p193
        %p356 = pneg %p190
        %p357 = scmp.lt.s32.totalorder %s25, 1
        %s358 = scalar_select %p357, %s25, 1
        %s359 = smul.addr %s358, 2
        %s360 = smul.addr %s359, 2
        %s361 = scalar_lea.vmem %s8, %s360
        %p362 = pneg %p219
        %p363 = pneg %p216
        %p364 = pneg %p245
        %p365 = pneg %p242
        %s366 = sand.u32 %s232, 1
        %s367 = scalar_lea.sflag [#allocation4], %s366
        %s368 = sand.u32 %s232, 1
        %s369 = smul.addr %s368, 16
        %s370 = scalar_lea.vmem [#allocation7], %s369
        %p371 = scmp.lt.s32.totalorder %s25, 1
        %s372 = scalar_select %p371, %s25, 1
        %s373 = smul.addr %s372, 2
        %s374 = smul.addr %s373, 4
        %s375 = scalar_lea.vmem %s0, %s374
        %p376 = scmp.lt.s32.totalorder %s25, 1
        %s377 = scalar_select %p376, %s25, 1
        %s378 = smul.addr %s377, 2
        %s379 = smul.addr %s378, 2
        %s380 = scalar_lea.vmem %s8, %s379
        %v382 = vld [vmem:[%s375] sm:$0xf]
        %v383 = vld [vmem:[%s375 + $0x4] sm:$0xf]
        %v384 = vld [vmem:[%s1] sm:$0xf]
        %v387 = vunpack.c.l.b16 %v382
        %v388 = vunpack.c.l.b16 %v383
        %v389 = vpack.c.b16 %v388, %v387
        %vm390 = vcmask 64512
        %v392 = vsel %vm390, %v389, 0
        %vm394 = vcmask 1043456
        %v396 = vsel %vm394, %v384, 0
        %398 = vmatprep.subr.bf16.mxu0 0
        %399 = vmatpush1.bf16.msra.mxu0 %v396
        %400 = vmatprep.subr.bf16.mxu0 0
        %401 = vmatpush1.bf16.msra.mxu0 0
        %402 = vmatprep.subr.bf16.mxu0 0
        %403 = vmatpush1.bf16.msra.mxu0 0
        %404 = vmatprep.subr.bf16.mxu0 0
        %405 = vmatpush1.bf16.msra.mxu0 0
        %406 = vmatprep.subr.bf16.mxu0 0
        %407 = vmatpush1.bf16.msra.mxu0 0
        %408 = vmatprep.subr.bf16.mxu0 0
        %409 = vmatpush1.bf16.msra.mxu0 0
        %410 = vmatprep.subr.bf16.mxu0 0
        %411 = vmatpush1.bf16.msra.mxu0 0
        %412 = vmatprep.subr.bf16.mxu0 0
        %413 = vmatpush1.bf16.msra.mxu0 0
        %414 = vmatprep.subr.bf16.mxu0 0
        %415 = vmatpush1.bf16.msra.mxu0 0
        %416 = vmatprep.subr.bf16.mxu0 0
        %417 = vmatpush1.bf16.msra.mxu0 0
        %418 = vmatprep.subr.bf16.mxu0 0
        %419 = vmatpush1.bf16.msra.mxu0 0
        %420 = vmatprep.subr.bf16.mxu0 0
        %421 = vmatpush1.bf16.msra.mxu0 0
        %422 = vmatprep.subr.bf16.mxu0 0
        %423 = vmatpush1.bf16.msra.mxu0 0
        %424 = vmatprep.subr.bf16.mxu0 0
        %425 = vmatpush1.bf16.msra.mxu0 0
        %426 = vmatprep.subr.bf16.mxu0 0
        %427 = vmatpush1.bf16.msra.mxu0 0
        %428 = vmatprep.subr.bf16.mxu0 0
        %429 = vmatpush1.bf16.msra.mxu0 0
        %430 = vmatprep.mubr.bf16.mxu0 0
        %431 = vmatmul.mubr.bf16.gmra.mrb[0].mxu0 %v392
        %v432 = vpop.f32.mrb[0].mxu0
        %v433 = vadd.f32 0.0, %v432
        %v434 = vpop.f32.mrb[0].mxu0
        %v435 = vpop.f32.mrb[0].mxu0
        %v436 = vadd.f32 0.0, %v435
        %v437 = vpop.f32.mrb[0].mxu0
        %438 = vdwg.mxu0
        %v439 = vld [vmem:[%s4] sm:$0xff]
        %v440 = vld [vmem:[%s4 + $0x8] sm:$0xff]
        %v441 = vld [vmem:[%s4 + $0x10] sm:$0xff]
        %v442 = vld [vmem:[%s4 + $0x18] sm:$0xff]
        %v443 = vld [vmem:[%s4 + $0x20] sm:$0xff]
        %v444 = vld [vmem:[%s4 + $0x28] sm:$0xff]
        %v445 = vld [vmem:[%s4 + $0x30] sm:$0xff]
        %v446 = vld [vmem:[%s4 + $0x38] sm:$0xff]
        %v447 = vld [vmem:[%s4 + $0x40] sm:$0xff]
        %v448 = vld [vmem:[%s4 + $0x48] sm:$0xff]
        %v449 = vld [vmem:[%s4 + $0x50] sm:$0xff]
        %v450 = vld [vmem:[%s4 + $0x58] sm:$0xff]
        %v451 = vld [vmem:[%s4 + $0x60] sm:$0xff]
        %v452 = vld [vmem:[%s4 + $0x68] sm:$0xff]
        %v453 = vld [vmem:[%s4 + $0x70] sm:$0xff]
        %v454 = vld [vmem:[%s4 + $0x78] sm:$0xff]
        %vm455 = vcmask 130048
        %v457 = vsel %vm455, %v439, 0
        %v460 = vsel %vm455, %v440, 0
        %v463 = vsel %vm455, %v441, 0
        %v466 = vsel %vm455, %v442, 0
        %v469 = vsel %vm455, %v443, 0
        %v472 = vsel %vm455, %v444, 0
        %v475 = vsel %vm455, %v445, 0
        %v478 = vsel %vm455, %v446, 0
        %v481 = vsel %vm455, %v447, 0
        %v484 = vsel %vm455, %v448, 0
        %v487 = vsel %vm455, %v449, 0
        %v490 = vsel %vm455, %v450, 0
        %v493 = vsel %vm455, %v451, 0
        %v496 = vsel %vm455, %v452, 0
        %v499 = vsel %vm455, %v453, 0
        %v502 = vsel %vm455, %v454, 0
        %504 = vmatprep.subr.mxu0 0.0
        %505 = vmatpush1.msra.mxu0 %v433
        %506 = vmatprep.subr.mxu0 0.0
        %507 = vmatpush1.msra.mxu0 %v436
        %508 = vmatprep.subr.mxu0 0.0
        %509 = vmatpush1.msra.mxu0 0.0
        %510 = vmatprep.subr.mxu0 0.0
        %511 = vmatpush1.msra.mxu0 0.0
        %512 = vmatprep.subr.mxu0 0.0
        %513 = vmatpush1.msra.mxu0 0.0
        %514 = vmatprep.subr.mxu0 0.0
        %515 = vmatpush1.msra.mxu0 0.0
        %516 = vmatprep.subr.mxu0 0.0
        %517 = vmatpush1.msra.mxu0 0.0
        %518 = vmatprep.subr.mxu0 0.0
        %519 = vmatpush1.msra.mxu0 0.0
        %520 = vmatprep.subr.mxu0 0.0
        %521 = vmatpush1.msra.mxu0 0.0
        %522 = vmatprep.subr.mxu0 0.0
        %523 = vmatpush1.msra.mxu0 0.0
        %524 = vmatprep.subr.mxu0 0.0
        %525 = vmatpush1.msra.mxu0 0.0
        %526 = vmatprep.subr.mxu0 0.0
        %527 = vmatpush1.msra.mxu0 0.0
        %528 = vmatprep.subr.mxu0 0.0
        %529 = vmatpush1.msra.mxu0 0.0
        %530 = vmatprep.subr.mxu0 0.0
        %531 = vmatpush1.msra.mxu0 0.0
        %532 = vmatprep.subr.mxu0 0.0
        %533 = vmatpush1.msra.mxu0 0.0
        %534 = vmatprep.subr.mxu0 0.0
        %535 = vmatpush1.msra.mxu0 0.0
        %536 = vmatprep.subr.mxu0 0.0
        %537 = vmatpush1.msra.mxu0 0.0
        %538 = vmatprep.subr.mxu0 0.0
        %539 = vmatpush1.msra.mxu0 0.0
        %540 = vmatprep.subr.mxu0 0.0
        %541 = vmatpush1.msra.mxu0 0.0
        %542 = vmatprep.subr.mxu0 0.0
        %543 = vmatpush1.msra.mxu0 0.0
        %544 = vmatprep.subr.mxu0 0.0
        %545 = vmatpush1.msra.mxu0 0.0
        %546 = vmatprep.subr.mxu0 0.0
        %547 = vmatpush1.msra.mxu0 0.0
        %548 = vmatprep.subr.mxu0 0.0
        %549 = vmatpush1.msra.mxu0 0.0
        %550 = vmatprep.subr.mxu0 0.0
        %551 = vmatpush1.msra.mxu0 0.0
        %552 = vmatprep.subr.mxu0 0.0
        %553 = vmatpush1.msra.mxu0 0.0
        %554 = vmatprep.subr.mxu0 0.0
        %555 = vmatpush1.msra.mxu0 0.0
        %556 = vmatprep.subr.mxu0 0.0
        %557 = vmatpush1.msra.mxu0 0.0
        %558 = vmatprep.subr.mxu0 0.0
        %559 = vmatpush1.msra.mxu0 0.0
        %560 = vmatprep.subr.mxu0 0.0
        %561 = vmatpush1.msra.mxu0 0.0
        %562 = vmatprep.subr.mxu0 0.0
        %563 = vmatpush1.msra.mxu0 0.0
        %564 = vmatprep.subr.mxu0 0.0
        %565 = vmatpush1.msra.mxu0 0.0
        %566 = vmatprep.subr.mxu0 0.0
        %567 = vmatpush1.msra.mxu0 0.0
        %568 = vmatprep.mubr.f32.mxu0 0.0
        %569 = vmatmul.mubr.f32.gmra.mrb[0].mxu0 %v457
        %v570 = vpop.f32.mrb[0].mxu0
        %v571 = vadd.f32 0.0, %v570
        %v572 = vpop.f32.mrb[0].mxu0
        %573 = vmatprep.mubr.f32.mxu0 0.0
        %574 = vmatmul.mubr.f32.gmra.mrb[0].mxu0 %v460
        %v575 = vpop.f32.mrb[0].mxu0
        %v576 = vadd.f32 0.0, %v575
        %v577 = vpop.f32.mrb[0].mxu0
        %578 = vmatprep.mubr.f32.mxu0 0.0
        %579 = vmatmul.mubr.f32.gmra.mrb[0].mxu0 %v463
        %v580 = vpop.f32.mrb[0].mxu0
        %v581 = vadd.f32 0.0, %v580
        %v582 = vpop.f32.mrb[0].mxu0
        %583 = vmatprep.mubr.f32.mxu0 0.0
        %584 = vmatmul.mubr.f32.gmra.mrb[0].mxu0 %v466
        %v585 = vpop.f32.mrb[0].mxu0
        %v586 = vadd.f32 0.0, %v585
        %v587 = vpop.f32.mrb[0].mxu0
        %588 = vmatprep.mubr.f32.mxu0 0.0
        %589 = vmatmul.mubr.f32.gmra.mrb[0].mxu0 %v469
        %v590 = vpop.f32.mrb[0].mxu0
        %v591 = vadd.f32 0.0, %v590
        %v592 = vpop.f32.mrb[0].mxu0
        %593 = vmatprep.mubr.f32.mxu0 0.0
        %594 = vmatmul.mubr.f32.gmra.mrb[0].mxu0 %v472
        %v595 = vpop.f32.mrb[0].mxu0
        %v596 = vadd.f32 0.0, %v595
        %v597 = vpop.f32.mrb[0].mxu0
        %598 = vmatprep.mubr.f32.mxu0 0.0
        %599 = vmatmul.mubr.f32.gmra.mrb[0].mxu0 %v475
        %v600 = vpop.f32.mrb[0].mxu0
        %v601 = vadd.f32 0.0, %v600
        %v602 = vpop.f32.mrb[0].mxu0
        %603 = vmatprep.mubr.f32.mxu0 0.0
        %604 = vmatmul.mubr.f32.gmra.mrb[0].mxu0 %v478
        %v605 = vpop.f32.mrb[0].mxu0
        %v606 = vadd.f32 0.0, %v605
        %v607 = vpop.f32.mrb[0].mxu0
        %608 = vmatprep.mubr.f32.mxu0 0.0
        %609 = vmatmul.mubr.f32.gmra.mrb[0].mxu0 %v481
        %v610 = vpop.f32.mrb[0].mxu0
        %v611 = vadd.f32 0.0, %v610
        %v612 = vpop.f32.mrb[0].mxu0
        %613 = vmatprep.mubr.f32.mxu0 0.0
        %614 = vmatmul.mubr.f32.gmra.mrb[0].mxu0 %v484
        %v615 = vpop.f32.mrb[0].mxu0
        %v616 = vadd.f32 0.0, %v615
        %v617 = vpop.f32.mrb[0].mxu0
        %618 = vmatprep.mubr.f32.mxu0 0.0
        %619 = vmatmul.mubr.f32.gmra.mrb[0].mxu0 %v487
        %v620 = vpop.f32.mrb[0].mxu0
        %v621 = vadd.f32 0.0, %v620
        %v622 = vpop.f32.mrb[0].mxu0
        %623 = vmatprep.mubr.f32.mxu0 0.0
        %624 = vmatmul.mubr.f32.gmra.mrb[0].mxu0 %v490
        %v625 = vpop.f32.mrb[0].mxu0
        %v626 = vadd.f32 0.0, %v625
        %v627 = vpop.f32.mrb[0].mxu0
        %628 = vmatprep.mubr.f32.mxu0 0.0
        %629 = vmatmul.mubr.f32.gmra.mrb[0].mxu0 %v493
        %v630 = vpop.f32.mrb[0].mxu0
        %v631 = vadd.f32 0.0, %v630
        %v632 = vpop.f32.mrb[0].mxu0
        %633 = vmatprep.mubr.f32.mxu0 0.0
        %634 = vmatmul.mubr.f32.gmra.mrb[0].mxu0 %v496
        %v635 = vpop.f32.mrb[0].mxu0
        %v636 = vadd.f32 0.0, %v635
        %v637 = vpop.f32.mrb[0].mxu0
        %638 = vmatprep.mubr.f32.mxu0 0.0
        %639 = vmatmul.mubr.f32.gmra.mrb[0].mxu0 %v499
        %v640 = vpop.f32.mrb[0].mxu0
        %v641 = vadd.f32 0.0, %v640
        %v642 = vpop.f32.mrb[0].mxu0
        %643 = vmatprep.mubr.f32.mxu0 0.0
        %644 = vmatmul.mubr.f32.gmra.mrb[0].mxu0 %v502
        %v645 = vpop.f32.mrb[0].mxu0
        %v646 = vadd.f32 0.0, %v645
        %v647 = vpop.f32.mrb[0].mxu0
        %648 = vdwg.mxu0
        %v649 = vld [vmem:[#allocation5] sm:$0xff]
        %v650 = vld [vmem:[#allocation5 + $0x8] sm:$0xff]
        %v651 = vld [vmem:[#allocation5 + $0x10] sm:$0xff]
        %v652 = vld [vmem:[#allocation5 + $0x18] sm:$0xff]
        %v653 = vld [vmem:[#allocation5 + $0x20] sm:$0xff]
        %v654 = vld [vmem:[#allocation5 + $0x28] sm:$0xff]
        %v655 = vld [vmem:[#allocation5 + $0x30] sm:$0xff]
        %v656 = vld [vmem:[#allocation5 + $0x38] sm:$0xff]
        %v657 = vld [vmem:[#allocation5 + $0x40] sm:$0xff]
        %v658 = vld [vmem:[#allocation5 + $0x48] sm:$0xff]
        %v659 = vld [vmem:[#allocation5 + $0x50] sm:$0xff]
        %v660 = vld [vmem:[#allocation5 + $0x58] sm:$0xff]
        %v661 = vld [vmem:[#allocation5 + $0x60] sm:$0xff]
        %v662 = vld [vmem:[#allocation5 + $0x68] sm:$0xff]
        %v663 = vld [vmem:[#allocation5 + $0x70] sm:$0xff]
        %v664 = vld [vmem:[#allocation5 + $0x78] sm:$0xff]
        %v665 = vld [vmem:[%s2] sm:$0xff]
        %v666 = vld [vmem:[%s2 + $0x8] sm:$0xff]
        %v667 = vld [vmem:[%s2 + $0x10] sm:$0xff]
        %v668 = vld [vmem:[%s2 + $0x18] sm:$0xff]
        %v669 = vld [vmem:[%s2 + $0x20] sm:$0xff]
        %v670 = vld [vmem:[%s2 + $0x28] sm:$0xff]
        %v671 = vld [vmem:[%s2 + $0x30] sm:$0xff]
        %v672 = vld [vmem:[%s2 + $0x38] sm:$0xff]
        %v673 = vld [vmem:[%s2 + $0x40] sm:$0xff]
        %v674 = vld [vmem:[%s2 + $0x48] sm:$0xff]
        %v675 = vld [vmem:[%s2 + $0x50] sm:$0xff]
        %v676 = vld [vmem:[%s2 + $0x58] sm:$0xff]
        %v677 = vld [vmem:[%s2 + $0x60] sm:$0xff]
        %v678 = vld [vmem:[%s2 + $0x68] sm:$0xff]
        %v679 = vld [vmem:[%s2 + $0x70] sm:$0xff]
        %v680 = vld [vmem:[%s2 + $0x78] sm:$0xff]
        %v681 = vmul.f32 %v571, %v665
        %v682 = vmul.f32 %v576, %v666
        %v683 = vmul.f32 %v581, %v667
        %v684 = vmul.f32 %v586, %v668
        %v685 = vmul.f32 %v591, %v669
        %v686 = vmul.f32 %v596, %v670
        %v687 = vmul.f32 %v601, %v671
        %v688 = vmul.f32 %v606, %v672
        %v689 = vmul.f32 %v611, %v673
        %v690 = vmul.f32 %v616, %v674
        %v691 = vmul.f32 %v621, %v675
        %v692 = vmul.f32 %v626, %v676
        %v693 = vmul.f32 %v631, %v677
        %v694 = vmul.f32 %v636, %v678
        %v695 = vmul.f32 %v641, %v679
        %v696 = vmul.f32 %v646, %v680
        %697 = vadd.xlane.f32.xlu0 %v681
        %v698 = vpop.xlane.xlu0 %697
        %699 = vadd.xlane.f32.xlu0 %v682
        %v700 = vpop.xlane.xlu0 %699
        %701 = vadd.xlane.f32.xlu0 %v683
        %v702 = vpop.xlane.xlu0 %701
        %703 = vadd.xlane.f32.xlu0 %v684
        %v704 = vpop.xlane.xlu0 %703
        %705 = vadd.xlane.f32.xlu0 %v685
        %v706 = vpop.xlane.xlu0 %705
        %707 = vadd.xlane.f32.xlu0 %v686
        %v708 = vpop.xlane.xlu0 %707
        %709 = vadd.xlane.f32.xlu0 %v687
        %v710 = vpop.xlane.xlu0 %709
        %711 = vadd.xlane.f32.xlu0 %v688
        %v712 = vpop.xlane.xlu0 %711
        %713 = vadd.xlane.f32.xlu0 %v689
        %v714 = vpop.xlane.xlu0 %713
        %715 = vadd.xlane.f32.xlu0 %v690
        %v716 = vpop.xlane.xlu0 %715
        %717 = vadd.xlane.f32.xlu0 %v691
        %v718 = vpop.xlane.xlu0 %717
        %719 = vadd.xlane.f32.xlu0 %v692
        %v720 = vpop.xlane.xlu0 %719
        %721 = vadd.xlane.f32.xlu0 %v693
        %v722 = vpop.xlane.xlu0 %721
        %723 = vadd.xlane.f32.xlu0 %v694
        %v724 = vpop.xlane.xlu0 %723
        %725 = vadd.xlane.f32.xlu0 %v695
        %v726 = vpop.xlane.xlu0 %725
        %727 = vadd.xlane.f32.xlu0 %v696
        %v728 = vpop.xlane.xlu0 %727
        %v729 = vld [vmem:[#allocation2] sm:$0xff]
        %v730 = vld [vmem:[#allocation2 + $0x8] sm:$0xff]
        %v731 = vld [vmem:[#allocation2 + $0x10] sm:$0xff]
        %v732 = vld [vmem:[#allocation2 + $0x18] sm:$0xff]
        %v733 = vld [vmem:[#allocation2 + $0x20] sm:$0xff]
        %v734 = vld [vmem:[#allocation2 + $0x28] sm:$0xff]
        %v735 = vld [vmem:[#allocation2 + $0x30] sm:$0xff]
        %v736 = vld [vmem:[#allocation2 + $0x38] sm:$0xff]
        %v737 = vld [vmem:[#allocation2 + $0x40] sm:$0xff]
        %v738 = vld [vmem:[#allocation2 + $0x48] sm:$0xff]
        %v739 = vld [vmem:[#allocation2 + $0x50] sm:$0xff]
        %v740 = vld [vmem:[#allocation2 + $0x58] sm:$0xff]
        %v741 = vld [vmem:[#allocation2 + $0x60] sm:$0xff]
        %v742 = vld [vmem:[#allocation2 + $0x68] sm:$0xff]
        %v743 = vld [vmem:[#allocation2 + $0x70] sm:$0xff]
        %v744 = vld [vmem:[#allocation2 + $0x78] sm:$0xff]
        %745 = vmatprep.subr.mxu0 0.0
        %746 = vmatpush1.xpose.msra.mxu0 %v433
        %747 = vmatprep.subr.mxu0 0.0
        %748 = vmatpush1.xpose.msra.mxu0 %v436
        %749 = vmatprep.subr.mxu0 0.0
        %750 = vmatpush1.xpose.msra.mxu0 0.0
        %751 = vmatprep.subr.mxu0 0.0
        %752 = vmatpush1.xpose.msra.mxu0 0.0
        %753 = vmatprep.subr.mxu0 0.0
        %754 = vmatpush1.xpose.msra.mxu0 0.0
        %755 = vmatprep.subr.mxu0 0.0
        %756 = vmatpush1.xpose.msra.mxu0 0.0
        %757 = vmatprep.subr.mxu0 0.0
        %758 = vmatpush1.xpose.msra.mxu0 0.0
        %759 = vmatprep.subr.mxu0 0.0
        %760 = vmatpush1.xpose.msra.mxu0 0.0
        %761 = vmatprep.subr.mxu0 0.0
        %762 = vmatpush1.xpose.msra.mxu0 0.0
        %763 = vmatprep.subr.mxu0 0.0
        %764 = vmatpush1.xpose.msra.mxu0 0.0
        %765 = vmatprep.subr.mxu0 0.0
        %766 = vmatpush1.xpose.msra.mxu0 0.0
        %767 = vmatprep.subr.mxu0 0.0
        %768 = vmatpush1.xpose.msra.mxu0 0.0
        %769 = vmatprep.subr.mxu0 0.0
        %770 = vmatpush1.xpose.msra.mxu0 0.0
        %771 = vmatprep.subr.mxu0 0.0
        %772 = vmatpush1.xpose.msra.mxu0 0.0
        %773 = vmatprep.subr.mxu0 0.0
        %774 = vmatpush1.xpose.msra.mxu0 0.0
        %775 = vmatprep.subr.mxu0 0.0
        %776 = vmatpush1.xpose.msra.mxu0 0.0
        %777 = vmatprep.subr.mxu0 0.0
        %778 = vmatpush1.xpose.msra.mxu0 0.0
        %779 = vmatprep.subr.mxu0 0.0
        %780 = vmatpush1.xpose.msra.mxu0 0.0
        %781 = vmatprep.subr.mxu0 0.0
        %782 = vmatpush1.xpose.msra.mxu0 0.0
        %783 = vmatprep.subr.mxu0 0.0
        %784 = vmatpush1.xpose.msra.mxu0 0.0
        %785 = vmatprep.subr.mxu0 0.0
        %786 = vmatpush1.xpose.msra.mxu0 0.0
        %787 = vmatprep.subr.mxu0 0.0
        %788 = vmatpush1.xpose.msra.mxu0 0.0
        %789 = vmatprep.subr.mxu0 0.0
        %790 = vmatpush1.xpose.msra.mxu0 0.0
        %791 = vmatprep.subr.mxu0 0.0
        %792 = vmatpush1.xpose.msra.mxu0 0.0
        %793 = vmatprep.subr.mxu0 0.0
        %794 = vmatpush1.xpose.msra.mxu0 0.0
        %795 = vmatprep.subr.mxu0 0.0
        %796 = vmatpush1.xpose.msra.mxu0 0.0
        %797 = vmatprep.subr.mxu0 0.0
        %798 = vmatpush1.xpose.msra.mxu0 0.0
        %799 = vmatprep.subr.mxu0 0.0
        %800 = vmatpush1.xpose.msra.mxu0 0.0
        %801 = vmatprep.subr.mxu0 0.0
        %802 = vmatpush1.xpose.msra.mxu0 0.0
        %803 = vmatprep.subr.mxu0 0.0
        %804 = vmatpush1.xpose.msra.mxu0 0.0
        %805 = vmatprep.subr.mxu0 0.0
        %806 = vmatpush1.xpose.msra.mxu0 0.0
        %807 = vmatprep.subr.mxu0 0.0
        %808 = vmatpush1.xpose.msra.mxu0 0.0
        %809 = vmatprep.mubr.f32.mxu0 0.0
        %810 = vmatmul.mubr.f32.gmra.mrb[0].mxu0 %v729
        %v811 = vpop.f32.mrb[0].mxu0
        %v812 = vadd.f32 0.0, %v811
        %v813 = vpop.f32.mrb[0].mxu0
        %814 = vmatprep.mubr.f32.mxu0 0.0
        %815 = vmatmul.mubr.f32.gmra.mrb[0].mxu0 %v730
        %v816 = vpop.f32.mrb[0].mxu0
        %v817 = vadd.f32 0.0, %v816
        %v818 = vpop.f32.mrb[0].mxu0
        %819 = vmatprep.mubr.f32.mxu0 0.0
        %820 = vmatmul.mubr.f32.gmra.mrb[0].mxu0 %v731
        %v821 = vpop.f32.mrb[0].mxu0
        %v822 = vadd.f32 0.0, %v821
        %v823 = vpop.f32.mrb[0].mxu0
        %824 = vmatprep.mubr.f32.mxu0 0.0
        %825 = vmatmul.mubr.f32.gmra.mrb[0].mxu0 %v732
        %v826 = vpop.f32.mrb[0].mxu0
        %v827 = vadd.f32 0.0, %v826
        %v828 = vpop.f32.mrb[0].mxu0
        %829 = vmatprep.mubr.f32.mxu0 0.0
        %830 = vmatmul.mubr.f32.gmra.mrb[0].mxu0 %v733
        %v831 = vpop.f32.mrb[0].mxu0
        %v832 = vadd.f32 0.0, %v831
        %v833 = vpop.f32.mrb[0].mxu0
        %834 = vmatprep.mubr.f32.mxu0 0.0
        %835 = vmatmul.mubr.f32.gmra.mrb[0].mxu0 %v734
        %v836 = vpop.f32.mrb[0].mxu0
        %v837 = vadd.f32 0.0, %v836
        %v838 = vpop.f32.mrb[0].mxu0
        %839 = vmatprep.mubr.f32.mxu0 0.0
        %840 = vmatmul.mubr.f32.gmra.mrb[0].mxu0 %v735
        %v841 = vpop.f32.mrb[0].mxu0
        %v842 = vadd.f32 0.0, %v841
        %v843 = vpop.f32.mrb[0].mxu0
        %844 = vmatprep.mubr.f32.mxu0 0.0
        %845 = vmatmul.mubr.f32.gmra.mrb[0].mxu0 %v736
        %v846 = vpop.f32.mrb[0].mxu0
        %v847 = vadd.f32 0.0, %v846
        %v848 = vpop.f32.mrb[0].mxu0
        %849 = vmatprep.mubr.f32.mxu0 0.0
        %850 = vmatmul.mubr.f32.gmra.mrb[0].mxu0 %v737
        %v851 = vpop.f32.mrb[0].mxu0
        %v852 = vadd.f32 0.0, %v851
        %v853 = vpop.f32.mrb[0].mxu0
        %854 = vmatprep.mubr.f32.mxu0 0.0
        %855 = vmatmul.mubr.f32.gmra.mrb[0].mxu0 %v738
        %v856 = vpop.f32.mrb[0].mxu0
        %v857 = vadd.f32 0.0, %v856
        %v858 = vpop.f32.mrb[0].mxu0
        %859 = vmatprep.mubr.f32.mxu0 0.0
        %860 = vmatmul.mubr.f32.gmra.mrb[0].mxu0 %v739
        %v861 = vpop.f32.mrb[0].mxu0
        %v862 = vadd.f32 0.0, %v861
        %v863 = vpop.f32.mrb[0].mxu0
        %864 = vmatprep.mubr.f32.mxu0 0.0
        %865 = vmatmul.mubr.f32.gmra.mrb[0].mxu0 %v740
        %v866 = vpop.f32.mrb[0].mxu0
        %v867 = vadd.f32 0.0, %v866
        %v868 = vpop.f32.mrb[0].mxu0
        %869 = vmatprep.mubr.f32.mxu0 0.0
        %870 = vmatmul.mubr.f32.gmra.mrb[0].mxu0 %v741
        %v871 = vpop.f32.mrb[0].mxu0
        %v872 = vadd.f32 0.0, %v871
        %v873 = vpop.f32.mrb[0].mxu0
        %874 = vmatprep.mubr.f32.mxu0 0.0
        %875 = vmatmul.mubr.f32.gmra.mrb[0].mxu0 %v742
        %v876 = vpop.f32.mrb[0].mxu0
        %v877 = vadd.f32 0.0, %v876
        %v878 = vpop.f32.mrb[0].mxu0
        %879 = vmatprep.mubr.f32.mxu0 0.0
        %880 = vmatmul.mubr.f32.gmra.mrb[0].mxu0 %v743
        %v881 = vpop.f32.mrb[0].mxu0
        %v882 = vadd.f32 0.0, %v881
        %v883 = vpop.f32.mrb[0].mxu0
        %884 = vmatprep.mubr.f32.mxu0 0.0
        %885 = vmatmul.mubr.f32.gmra.mrb[0].mxu0 %v744
        %v886 = vpop.f32.mrb[0].mxu0
        %v887 = vadd.f32 0.0, %v886
        %v888 = vpop.f32.mrb[0].mxu0
        %889 = vdwg.mxu0
        %v890 = vadd.f32 %v698, %v812
        %v891 = vadd.f32 %v700, %v817
        %v892 = vadd.f32 %v702, %v822
        %v893 = vadd.f32 %v704, %v827
        %v894 = vadd.f32 %v706, %v832
        %v895 = vadd.f32 %v708, %v837
        %v896 = vadd.f32 %v710, %v842
        %v897 = vadd.f32 %v712, %v847
        %v898 = vadd.f32 %v714, %v852
        %v899 = vadd.f32 %v716, %v857
        %v900 = vadd.f32 %v718, %v862
        %v901 = vadd.f32 %v720, %v867
        %v902 = vadd.f32 %v722, %v872
        %v903 = vadd.f32 %v724, %v877
        %v904 = vadd.f32 %v726, %v882
        %v905 = vadd.f32 %v728, %v887
        %vm906 = vcmp.gt.f32.partialorder %v890, 0.0
        %vm907 = vcmp.gt.f32.partialorder %v891, 0.0
        %vm908 = vcmp.gt.f32.partialorder %v892, 0.0
        %vm909 = vcmp.gt.f32.partialorder %v893, 0.0
        %vm910 = vcmp.gt.f32.partialorder %v894, 0.0
        %vm911 = vcmp.gt.f32.partialorder %v895, 0.0
        %vm912 = vcmp.gt.f32.partialorder %v896, 0.0
        %vm913 = vcmp.gt.f32.partialorder %v897, 0.0
        %vm914 = vcmp.gt.f32.partialorder %v898, 0.0
        %vm915 = vcmp.gt.f32.partialorder %v899, 0.0
        %vm916 = vcmp.gt.f32.partialorder %v900, 0.0
        %vm917 = vcmp.gt.f32.partialorder %v901, 0.0
        %vm918 = vcmp.gt.f32.partialorder %v902, 0.0
        %vm919 = vcmp.gt.f32.partialorder %v903, 0.0
        %vm920 = vcmp.gt.f32.partialorder %v904, 0.0
        %vm921 = vcmp.gt.f32.partialorder %v905, 0.0
        %v922 = vmul.f32 %v890, 0.2
        %v923 = vmul.f32 %v891, 0.2
        %v924 = vmul.f32 %v892, 0.2
        %v925 = vmul.f32 %v893, 0.2
        %v926 = vmul.f32 %v894, 0.2
        %v927 = vmul.f32 %v895, 0.2
        %v928 = vmul.f32 %v896, 0.2
        %v929 = vmul.f32 %v897, 0.2
        %v930 = vmul.f32 %v898, 0.2
        %v931 = vmul.f32 %v899, 0.2
        %v932 = vmul.f32 %v900, 0.2
        %v933 = vmul.f32 %v901, 0.2
        %v934 = vmul.f32 %v902, 0.2
        %v935 = vmul.f32 %v903, 0.2
        %v936 = vmul.f32 %v904, 0.2
        %v937 = vmul.f32 %v905, 0.2
        %v938 = vsel %vm906, %v890, %v922
        %v939 = vsel %vm907, %v891, %v923
        %v940 = vsel %vm908, %v892, %v924
        %v941 = vsel %vm909, %v893, %v925
        %v942 = vsel %vm910, %v894, %v926
        %v943 = vsel %vm911, %v895, %v927
        %v944 = vsel %vm912, %v896, %v928
        %v945 = vsel %vm913, %v897, %v929
        %v946 = vsel %vm914, %v898, %v930
        %v947 = vsel %vm915, %v899, %v931
        %v948 = vsel %vm916, %v900, %v932
        %v949 = vsel %vm917, %v901, %v933
        %v950 = vsel %vm918, %v902, %v934
        %v951 = vsel %vm919, %v903, %v935
        %v952 = vsel %vm920, %v904, %v936
        %v953 = vsel %vm921, %v905, %v937
        %v954 = vld [vmem:[%s380] sm:$0x3]
        %v955 = vld [vmem:[%s380 + $0x2] sm:$0x3]
        %v956 = vunpack.c.0.s8 %v954
        %v957 = vunpack.c.0.s8 %v955
        %v958 = vcvt.s32.f32 %v956
        %v959 = vcvt.s32.f32 %v957
        %960 = vmatprep.subr.mxu0 0.0
        %961 = vmatpush1.msra.mxu0 %v958
        %962 = vmatprep.subr.mxu0 0.0
        %963 = vmatpush1.msra.mxu0 %v959
        %964 = vmatprep.subr.mxu0 0.0
        %965 = vmatpush1.msra.mxu0 0.0
        %966 = vmatprep.subr.mxu0 0.0
        %967 = vmatpush1.msra.mxu0 0.0
        %968 = vmatprep.subr.mxu0 0.0
        %969 = vmatpush1.msra.mxu0 0.0
        %970 = vmatprep.subr.mxu0 0.0
        %971 = vmatpush1.msra.mxu0 0.0
        %972 = vmatprep.subr.mxu0 0.0
        %973 = vmatpush1.msra.mxu0 0.0
        %974 = vmatprep.subr.mxu0 0.0
        %975 = vmatpush1.msra.mxu0 0.0
        %976 = vmatprep.subr.mxu0 0.0
        %977 = vmatpush1.msra.mxu0 0.0
        %978 = vmatprep.subr.mxu0 0.0
        %979 = vmatpush1.msra.mxu0 0.0
        %980 = vmatprep.subr.mxu0 0.0
        %981 = vmatpush1.msra.mxu0 0.0
        %982 = vmatprep.subr.mxu0 0.0
        %983 = vmatpush1.msra.mxu0 0.0
        %984 = vmatprep.subr.mxu0 0.0
        %985 = vmatpush1.msra.mxu0 0.0
        %986 = vmatprep.subr.mxu0 0.0
        %987 = vmatpush1.msra.mxu0 0.0
        %988 = vmatprep.subr.mxu0 0.0
        %989 = vmatpush1.msra.mxu0 0.0
        %990 = vmatprep.subr.mxu0 0.0
        %991 = vmatpush1.msra.mxu0 0.0
        %992 = vmatprep.subr.mxu0 0.0
        %993 = vmatpush1.msra.mxu0 0.0
        %994 = vmatprep.subr.mxu0 0.0
        %995 = vmatpush1.msra.mxu0 0.0
        %996 = vmatprep.subr.mxu0 0.0
        %997 = vmatpush1.msra.mxu0 0.0
        %998 = vmatprep.subr.mxu0 0.0
        %999 = vmatpush1.msra.mxu0 0.0
        %1000 = vmatprep.subr.mxu0 0.0
        %1001 = vmatpush1.msra.mxu0 0.0
        %1002 = vmatprep.subr.mxu0 0.0
        %1003 = vmatpush1.msra.mxu0 0.0
        %1004 = vmatprep.subr.mxu0 0.0
        %1005 = vmatpush1.msra.mxu0 0.0
        %1006 = vmatprep.subr.mxu0 0.0
        %1007 = vmatpush1.msra.mxu0 0.0
        %1008 = vmatprep.subr.mxu0 0.0
        %1009 = vmatpush1.msra.mxu0 0.0
        %1010 = vmatprep.subr.mxu0 0.0
        %1011 = vmatpush1.msra.mxu0 0.0
        %1012 = vmatprep.subr.mxu0 0.0
        %1013 = vmatpush1.msra.mxu0 0.0
        %1014 = vmatprep.subr.mxu0 0.0
        %1015 = vmatpush1.msra.mxu0 0.0
        %1016 = vmatprep.subr.mxu0 0.0
        %1017 = vmatpush1.msra.mxu0 0.0
        %1018 = vmatprep.subr.mxu0 0.0
        %1019 = vmatpush1.msra.mxu0 0.0
        %1020 = vmatprep.subr.mxu0 0.0
        %1021 = vmatpush1.msra.mxu0 0.0
        %1022 = vmatprep.subr.mxu0 0.0
        %1023 = vmatpush1.msra.mxu0 0.0
        %1024 = vmatprep.mubr.f32.mxu0 0.0
        %1025 = vmatmul.mubr.f32.gmra.mrb[0].mxu0 %v457
        %v1026 = vpop.f32.mrb[0].mxu0
        %v1027 = vadd.f32 0.0, %v1026
        %v1028 = vpop.f32.mrb[0].mxu0
        %1029 = vmatprep.mubr.f32.mxu0 0.0
        %1030 = vmatmul.mubr.f32.gmra.mrb[0].mxu0 %v460
        %v1031 = vpop.f32.mrb[0].mxu0
        %v1032 = vadd.f32 0.0, %v1031
        %v1033 = vpop.f32.mrb[0].mxu0
        %1034 = vmatprep.mubr.f32.mxu0 0.0
        %1035 = vmatmul.mubr.f32.gmra.mrb[0].mxu0 %v463
        %v1036 = vpop.f32.mrb[0].mxu0
        %v1037 = vadd.f32 0.0, %v1036
        %v1038 = vpop.f32.mrb[0].mxu0
        %1039 = vmatprep.mubr.f32.mxu0 0.0
        %1040 = vmatmul.mubr.f32.gmra.mrb[0].mxu0 %v466
        %v1041 = vpop.f32.mrb[0].mxu0
        %v1042 = vadd.f32 0.0, %v1041
        %v1043 = vpop.f32.mrb[0].mxu0
        %1044 = vmatprep.mubr.f32.mxu0 0.0
        %1045 = vmatmul.mubr.f32.gmra.mrb[0].mxu0 %v469
        %v1046 = vpop.f32.mrb[0].mxu0
        %v1047 = vadd.f32 0.0, %v1046
        %v1048 = vpop.f32.mrb[0].mxu0
        %1049 = vmatprep.mubr.f32.mxu0 0.0
        %1050 = vmatmul.mubr.f32.gmra.mrb[0].mxu0 %v472
        %v1051 = vpop.f32.mrb[0].mxu0
        %v1052 = vadd.f32 0.0, %v1051
        %v1053 = vpop.f32.mrb[0].mxu0
        %1054 = vmatprep.mubr.f32.mxu0 0.0
        %1055 = vmatmul.mubr.f32.gmra.mrb[0].mxu0 %v475
        %v1056 = vpop.f32.mrb[0].mxu0
        %v1057 = vadd.f32 0.0, %v1056
        %v1058 = vpop.f32.mrb[0].mxu0
        %1059 = vmatprep.mubr.f32.mxu0 0.0
        %1060 = vmatmul.mubr.f32.gmra.mrb[0].mxu0 %v478
        %v1061 = vpop.f32.mrb[0].mxu0
        %v1062 = vadd.f32 0.0, %v1061
        %v1063 = vpop.f32.mrb[0].mxu0
        %1064 = vmatprep.mubr.f32.mxu0 0.0
        %1065 = vmatmul.mubr.f32.gmra.mrb[0].mxu0 %v481
        %v1066 = vpop.f32.mrb[0].mxu0
        %v1067 = vadd.f32 0.0, %v1066
        %v1068 = vpop.f32.mrb[0].mxu0
        %1069 = vmatprep.mubr.f32.mxu0 0.0
        %1070 = vmatmul.mubr.f32.gmra.mrb[0].mxu0 %v484
        %v1071 = vpop.f32.mrb[0].mxu0
        %v1072 = vadd.f32 0.0, %v1071
        %v1073 = vpop.f32.mrb[0].mxu0
        %1074 = vmatprep.mubr.f32.mxu0 0.0
        %1075 = vmatmul.mubr.f32.gmra.mrb[0].mxu0 %v487
        %v1076 = vpop.f32.mrb[0].mxu0
        %v1077 = vadd.f32 0.0, %v1076
        %v1078 = vpop.f32.mrb[0].mxu0
        %1079 = vmatprep.mubr.f32.mxu0 0.0
        %1080 = vmatmul.mubr.f32.gmra.mrb[0].mxu0 %v490
        %v1081 = vpop.f32.mrb[0].mxu0
        %v1082 = vadd.f32 0.0, %v1081
        %v1083 = vpop.f32.mrb[0].mxu0
        %1084 = vmatprep.mubr.f32.mxu0 0.0
        %1085 = vmatmul.mubr.f32.gmra.mrb[0].mxu0 %v493
        %v1086 = vpop.f32.mrb[0].mxu0
        %v1087 = vadd.f32 0.0, %v1086
        %v1088 = vpop.f32.mrb[0].mxu0
        %1089 = vmatprep.mubr.f32.mxu0 0.0
        %1090 = vmatmul.mubr.f32.gmra.mrb[0].mxu0 %v496
        %v1091 = vpop.f32.mrb[0].mxu0
        %v1092 = vadd.f32 0.0, %v1091
        %v1093 = vpop.f32.mrb[0].mxu0
        %1094 = vmatprep.mubr.f32.mxu0 0.0
        %1095 = vmatmul.mubr.f32.gmra.mrb[0].mxu0 %v499
        %v1096 = vpop.f32.mrb[0].mxu0
        %v1097 = vadd.f32 0.0, %v1096
        %v1098 = vpop.f32.mrb[0].mxu0
        %1099 = vmatprep.mubr.f32.mxu0 0.0
        %1100 = vmatmul.mubr.f32.gmra.mrb[0].mxu0 %v502
        %v1101 = vpop.f32.mrb[0].mxu0
        %v1102 = vadd.f32 0.0, %v1101
        %v1103 = vpop.f32.mrb[0].mxu0
        %1104 = vdwg.mxu0
        %vm1105 = vcmp.gt.f32.partialorder %v1027, 0.5
        %vm1106 = vcmp.gt.f32.partialorder %v1032, 0.5
        %vm1107 = vcmp.gt.f32.partialorder %v1037, 0.5
        %vm1108 = vcmp.gt.f32.partialorder %v1042, 0.5
        %vm1109 = vcmp.gt.f32.partialorder %v1047, 0.5
        %vm1110 = vcmp.gt.f32.partialorder %v1052, 0.5
        %vm1111 = vcmp.gt.f32.partialorder %v1057, 0.5
        %vm1112 = vcmp.gt.f32.partialorder %v1062, 0.5
        %vm1113 = vcmp.gt.f32.partialorder %v1067, 0.5
        %vm1114 = vcmp.gt.f32.partialorder %v1072, 0.5
        %vm1115 = vcmp.gt.f32.partialorder %v1077, 0.5
        %vm1116 = vcmp.gt.f32.partialorder %v1082, 0.5
        %vm1117 = vcmp.gt.f32.partialorder %v1087, 0.5
        %vm1118 = vcmp.gt.f32.partialorder %v1092, 0.5
        %vm1119 = vcmp.gt.f32.partialorder %v1097, 0.5
        %vm1120 = vcmp.gt.f32.partialorder %v1102, 0.5
        %v1121 = vsel %vm1105, 0.0, -1e+12
        %v1122 = vsel %vm1106, 0.0, -1e+12
        %v1123 = vsel %vm1107, 0.0, -1e+12
        %v1124 = vsel %vm1108, 0.0, -1e+12
        %v1125 = vsel %vm1109, 0.0, -1e+12
        %v1126 = vsel %vm1110, 0.0, -1e+12
        %v1127 = vsel %vm1111, 0.0, -1e+12
        %v1128 = vsel %vm1112, 0.0, -1e+12
        %v1129 = vsel %vm1113, 0.0, -1e+12
        %v1130 = vsel %vm1114, 0.0, -1e+12
        %v1131 = vsel %vm1115, 0.0, -1e+12
        %v1132 = vsel %vm1116, 0.0, -1e+12
        %v1133 = vsel %vm1117, 0.0, -1e+12
        %v1134 = vsel %vm1118, 0.0, -1e+12
        %v1135 = vsel %vm1119, 0.0, -1e+12
        %v1136 = vsel %vm1120, 0.0, -1e+12
        %v1137 = vadd.f32 %v938, %v1121
        %v1138 = vadd.f32 %v939, %v1122
        %v1139 = vadd.f32 %v940, %v1123
        %v1140 = vadd.f32 %v941, %v1124
        %v1141 = vadd.f32 %v942, %v1125
        %v1142 = vadd.f32 %v943, %v1126
        %v1143 = vadd.f32 %v944, %v1127
        %v1144 = vadd.f32 %v945, %v1128
        %v1145 = vadd.f32 %v946, %v1129
        %v1146 = vadd.f32 %v947, %v1130
        %v1147 = vadd.f32 %v948, %v1131
        %v1148 = vadd.f32 %v949, %v1132
        %v1149 = vadd.f32 %v950, %v1133
        %v1150 = vadd.f32 %v951, %v1134
        %v1151 = vadd.f32 %v952, %v1135
        %v1152 = vadd.f32 %v953, %v1136
        %v1153 = vsel %vm455, %v1137, -inf
        %1154 = vmax.xlane.f32.xlu0 %v1153
        %v1155 = vpop.xlane.xlu0 %1154
        %v1156 = vsel %vm455, %v1138, -inf
        %1157 = vmax.xlane.f32.xlu0 %v1156
        %v1158 = vpop.xlane.xlu0 %1157
        %v1159 = vsel %vm455, %v1139, -inf
        %1160 = vmax.xlane.f32.xlu0 %v1159
        %v1161 = vpop.xlane.xlu0 %1160
        %v1162 = vsel %vm455, %v1140, -inf
        %1163 = vmax.xlane.f32.xlu0 %v1162
        %v1164 = vpop.xlane.xlu0 %1163
        %v1165 = vsel %vm455, %v1141, -inf
        %1166 = vmax.xlane.f32.xlu0 %v1165
        %v1167 = vpop.xlane.xlu0 %1166
        %v1168 = vsel %vm455, %v1142, -inf
        %1169 = vmax.xlane.f32.xlu0 %v1168
        %v1170 = vpop.xlane.xlu0 %1169
        %v1171 = vsel %vm455, %v1143, -inf
        %1172 = vmax.xlane.f32.xlu0 %v1171
        %v1173 = vpop.xlane.xlu0 %1172
        %v1174 = vsel %vm455, %v1144, -inf
        %1175 = vmax.xlane.f32.xlu0 %v1174
        %v1176 = vpop.xlane.xlu0 %1175
        %v1177 = vsel %vm455, %v1145, -inf
        %1178 = vmax.xlane.f32.xlu0 %v1177
        %v1179 = vpop.xlane.xlu0 %1178
        %v1180 = vsel %vm455, %v1146, -inf
        %1181 = vmax.xlane.f32.xlu0 %v1180
        %v1182 = vpop.xlane.xlu0 %1181
        %v1183 = vsel %vm455, %v1147, -inf
        %1184 = vmax.xlane.f32.xlu0 %v1183
        %v1185 = vpop.xlane.xlu0 %1184
        %v1186 = vsel %vm455, %v1148, -inf
        %1187 = vmax.xlane.f32.xlu0 %v1186
        %v1188 = vpop.xlane.xlu0 %1187
        %v1189 = vsel %vm455, %v1149, -inf
        %1190 = vmax.xlane.f32.xlu0 %v1189
        %v1191 = vpop.xlane.xlu0 %1190
        %v1192 = vsel %vm455, %v1150, -inf
        %1193 = vmax.xlane.f32.xlu0 %v1192
        %v1194 = vpop.xlane.xlu0 %1193
        %v1195 = vsel %vm455, %v1151, -inf
        %1196 = vmax.xlane.f32.xlu0 %v1195
        %v1197 = vpop.xlane.xlu0 %1196
        %v1198 = vsel %vm455, %v1152, -inf
        %1199 = vmax.xlane.f32.xlu0 %v1198
        %v1200 = vpop.xlane.xlu0 %1199
        %v1201 = vsub.f32 %v1137, %v1155
        %v1202 = vsub.f32 %v1138, %v1158
        %v1203 = vsub.f32 %v1139, %v1161
        %v1204 = vsub.f32 %v1140, %v1164
        %v1205 = vsub.f32 %v1141, %v1167
        %v1206 = vsub.f32 %v1142, %v1170
        %v1207 = vsub.f32 %v1143, %v1173
        %v1208 = vsub.f32 %v1144, %v1176
        %v1209 = vsub.f32 %v1145, %v1179
        %v1210 = vsub.f32 %v1146, %v1182
        %v1211 = vsub.f32 %v1147, %v1185
        %v1212 = vsub.f32 %v1148, %v1188
        %v1213 = vsub.f32 %v1149, %v1191
        %v1214 = vsub.f32 %v1150, %v1194
        %v1215 = vsub.f32 %v1151, %v1197
        %v1216 = vsub.f32 %v1152, %v1200
        %v1217 = vmul.f32 %v1201, 1.442695
        %v1218 = vpow.pop %v1217
        %v1219 = vmul.f32 %v1202, 1.442695
        %v1220 = vpow.pop %v1219
        %v1221 = vmul.f32 %v1203, 1.442695
        %v1222 = vpow.pop %v1221
        %v1223 = vmul.f32 %v1204, 1.442695
        %v1224 = vpow.pop %v1223
        %v1225 = vmul.f32 %v1205, 1.442695
        %v1226 = vpow.pop %v1225
        %v1227 = vmul.f32 %v1206, 1.442695
        %v1228 = vpow.pop %v1227
        %v1229 = vmul.f32 %v1207, 1.442695
        %v1230 = vpow.pop %v1229
        %v1231 = vmul.f32 %v1208, 1.442695
        %v1232 = vpow.pop %v1231
        %v1233 = vmul.f32 %v1209, 1.442695
        %v1234 = vpow.pop %v1233
        %v1235 = vmul.f32 %v1210, 1.442695
        %v1236 = vpow.pop %v1235
        %v1237 = vmul.f32 %v1211, 1.442695
        %v1238 = vpow.pop %v1237
        %v1239 = vmul.f32 %v1212, 1.442695
        %v1240 = vpow.pop %v1239
        %v1241 = vmul.f32 %v1213, 1.442695
        %v1242 = vpow.pop %v1241
        %v1243 = vmul.f32 %v1214, 1.442695
        %v1244 = vpow.pop %v1243
        %v1245 = vmul.f32 %v1215, 1.442695
        %v1246 = vpow.pop %v1245
        %v1247 = vmul.f32 %v1216, 1.442695
        %v1248 = vpow.pop %v1247
        %v1249 = vsel %vm455, %v1218, 0.0
        %1250 = vadd.xlane.f32.xlu0 %v1249
        %v1251 = vpop.xlane.xlu0 %1250
        %v1252 = vsel %vm455, %v1220, 0.0
        %1253 = vadd.xlane.f32.xlu0 %v1252
        %v1254 = vpop.xlane.xlu0 %1253
        %v1255 = vsel %vm455, %v1222, 0.0
        %1256 = vadd.xlane.f32.xlu0 %v1255
        %v1257 = vpop.xlane.xlu0 %1256
        %v1258 = vsel %vm455, %v1224, 0.0
        %1259 = vadd.xlane.f32.xlu0 %v1258
        %v1260 = vpop.xlane.xlu0 %1259
        %v1261 = vsel %vm455, %v1226, 0.0
        %1262 = vadd.xlane.f32.xlu0 %v1261
        %v1263 = vpop.xlane.xlu0 %1262
        %v1264 = vsel %vm455, %v1228, 0.0
        %1265 = vadd.xlane.f32.xlu0 %v1264
        %v1266 = vpop.xlane.xlu0 %1265
        %v1267 = vsel %vm455, %v1230, 0.0
        %1268 = vadd.xlane.f32.xlu0 %v1267
        %v1269 = vpop.xlane.xlu0 %1268
        %v1270 = vsel %vm455, %v1232, 0.0
        %1271 = vadd.xlane.f32.xlu0 %v1270
        %v1272 = vpop.xlane.xlu0 %1271
        %v1273 = vsel %vm455, %v1234, 0.0
        %1274 = vadd.xlane.f32.xlu0 %v1273
        %v1275 = vpop.xlane.xlu0 %1274
        %v1276 = vsel %vm455, %v1236, 0.0
        %1277 = vadd.xlane.f32.xlu0 %v1276
        %v1278 = vpop.xlane.xlu0 %1277
        %v1279 = vsel %vm455, %v1238, 0.0
        %1280 = vadd.xlane.f32.xlu0 %v1279
        %v1281 = vpop.xlane.xlu0 %1280
        %v1282 = vsel %vm455, %v1240, 0.0
        %1283 = vadd.xlane.f32.xlu0 %v1282
        %v1284 = vpop.xlane.xlu0 %1283
        %v1285 = vsel %vm455, %v1242, 0.0
        %1286 = vadd.xlane.f32.xlu0 %v1285
        %v1287 = vpop.xlane.xlu0 %1286
        %v1288 = vsel %vm455, %v1244, 0.0
        %1289 = vadd.xlane.f32.xlu0 %v1288
        %v1290 = vpop.xlane.xlu0 %1289
        %v1291 = vsel %vm455, %v1246, 0.0
        %1292 = vadd.xlane.f32.xlu0 %v1291
        %v1293 = vpop.xlane.xlu0 %1292
        %v1294 = vsel %vm455, %v1248, 0.0
        %1295 = vadd.xlane.f32.xlu0 %v1294
        %v1296 = vpop.xlane.xlu0 %1295
        %v1297 = vrcp.pop %v1251
        %v1298 = vrcp.pop %v1254
        %v1299 = vrcp.pop %v1257
        %v1300 = vrcp.pop %v1260
        %v1301 = vrcp.pop %v1263
        %v1302 = vrcp.pop %v1266
        %v1303 = vrcp.pop %v1269
        %v1304 = vrcp.pop %v1272
        %v1305 = vrcp.pop %v1275
        %v1306 = vrcp.pop %v1278
        %v1307 = vrcp.pop %v1281
        %v1308 = vrcp.pop %v1284
        %v1309 = vrcp.pop %v1287
        %v1310 = vrcp.pop %v1290
        %v1311 = vrcp.pop %v1293
        %v1312 = vrcp.pop %v1296
        %v1313 = vmul.f32 %v1218, %v1297
        %v1314 = vmul.f32 %v1220, %v1298
        %v1315 = vmul.f32 %v1222, %v1299
        %v1316 = vmul.f32 %v1224, %v1300
        %v1317 = vmul.f32 %v1226, %v1301
        %v1318 = vmul.f32 %v1228, %v1302
        %v1319 = vmul.f32 %v1230, %v1303
        %v1320 = vmul.f32 %v1232, %v1304
        %v1321 = vmul.f32 %v1234, %v1305
        %v1322 = vmul.f32 %v1236, %v1306
        %v1323 = vmul.f32 %v1238, %v1307
        %v1324 = vmul.f32 %v1240, %v1308
        %v1325 = vmul.f32 %v1242, %v1309
        %v1326 = vmul.f32 %v1244, %v1310
        %v1327 = vmul.f32 %v1246, %v1311
        %v1328 = vmul.f32 %v1248, %v1312
        %v1329 = vpack.c.bf16 %v1314, %v1313
        %v1330 = vpack.c.bf16 %v1316, %v1315
        %v1331 = vpack.c.bf16 %v1318, %v1317
        %v1332 = vpack.c.bf16 %v1320, %v1319
        %v1333 = vpack.c.bf16 %v1322, %v1321
        %v1334 = vpack.c.bf16 %v1324, %v1323
        %v1335 = vpack.c.bf16 %v1326, %v1325
        %v1336 = vpack.c.bf16 %v1328, %v1327
        %v1337 = vpack.c.bf16 %v436, %v433
        %v1339 = vsel %vm455, %v1329, 0
        %v1342 = vsel %vm455, %v1330, 0
        %v1345 = vsel %vm455, %v1331, 0
        %v1348 = vsel %vm455, %v1332, 0
        %v1351 = vsel %vm455, %v1333, 0
        %v1354 = vsel %vm455, %v1334, 0
        %v1357 = vsel %vm455, %v1335, 0
        %v1360 = vsel %vm455, %v1336, 0
        %1362 = vmatprep.subr.bf16.mxu0 0
        %1363 = vmatpush1.bf16.msra.mxu0 %v1337
        %1364 = vmatprep.subr.bf16.mxu0 0
        %1365 = vmatpush1.bf16.msra.mxu0 0
        %1366 = vmatprep.subr.bf16.mxu0 0
        %1367 = vmatpush1.bf16.msra.mxu0 0
        %1368 = vmatprep.subr.bf16.mxu0 0
        %1369 = vmatpush1.bf16.msra.mxu0 0
        %1370 = vmatprep.subr.bf16.mxu0 0
        %1371 = vmatpush1.bf16.msra.mxu0 0
        %1372 = vmatprep.subr.bf16.mxu0 0
        %1373 = vmatpush1.bf16.msra.mxu0 0
        %1374 = vmatprep.subr.bf16.mxu0 0
        %1375 = vmatpush1.bf16.msra.mxu0 0
        %1376 = vmatprep.subr.bf16.mxu0 0
        %1377 = vmatpush1.bf16.msra.mxu0 0
        %1378 = vmatprep.subr.bf16.mxu0 0
        %1379 = vmatpush1.bf16.msra.mxu0 0
        %1380 = vmatprep.subr.bf16.mxu0 0
        %1381 = vmatpush1.bf16.msra.mxu0 0
        %1382 = vmatprep.subr.bf16.mxu0 0
        %1383 = vmatpush1.bf16.msra.mxu0 0
        %1384 = vmatprep.subr.bf16.mxu0 0
        %1385 = vmatpush1.bf16.msra.mxu0 0
        %1386 = vmatprep.subr.bf16.mxu0 0
        %1387 = vmatpush1.bf16.msra.mxu0 0
        %1388 = vmatprep.subr.bf16.mxu0 0
        %1389 = vmatpush1.bf16.msra.mxu0 0
        %1390 = vmatprep.subr.bf16.mxu0 0
        %1391 = vmatpush1.bf16.msra.mxu0 0
        %1392 = vmatprep.subr.bf16.mxu0 0
        %1393 = vmatpush1.bf16.msra.mxu0 0
        %1394 = vmatprep.mubr.bf16.mxu0 0
        %1395 = vmatmul.mubr.bf16.gmra.mrb[0].mxu0 %v1339
        %v1396 = vpop.f32.mrb[0].mxu0
        %v1397 = vadd.f32 0.0, %v1396
        %v1398 = vpop.f32.mrb[0].mxu0
        %v1399 = vpop.f32.mrb[0].mxu0
        %v1400 = vadd.f32 0.0, %v1399
        %v1401 = vpop.f32.mrb[0].mxu0
        %1402 = vmatprep.mubr.bf16.mxu0 0
        %1403 = vmatmul.mubr.bf16.gmra.mrb[0].mxu0 %v1342
        %v1404 = vpop.f32.mrb[0].mxu0
        %v1405 = vadd.f32 0.0, %v1404
        %v1406 = vpop.f32.mrb[0].mxu0
        %v1407 = vpop.f32.mrb[0].mxu0
        %v1408 = vadd.f32 0.0, %v1407
        %v1409 = vpop.f32.mrb[0].mxu0
        %1410 = vmatprep.mubr.bf16.mxu0 0
        %1411 = vmatmul.mubr.bf16.gmra.mrb[0].mxu0 %v1345
        %v1412 = vpop.f32.mrb[0].mxu0
        %v1413 = vadd.f32 0.0, %v1412
        %v1414 = vpop.f32.mrb[0].mxu0
        %v1415 = vpop.f32.mrb[0].mxu0
        %v1416 = vadd.f32 0.0, %v1415
        %v1417 = vpop.f32.mrb[0].mxu0
        %1418 = vmatprep.mubr.bf16.mxu0 0
        %1419 = vmatmul.mubr.bf16.gmra.mrb[0].mxu0 %v1348
        %v1420 = vpop.f32.mrb[0].mxu0
        %v1421 = vadd.f32 0.0, %v1420
        %v1422 = vpop.f32.mrb[0].mxu0
        %v1423 = vpop.f32.mrb[0].mxu0
        %v1424 = vadd.f32 0.0, %v1423
        %v1425 = vpop.f32.mrb[0].mxu0
        %1426 = vmatprep.mubr.bf16.mxu0 0
        %1427 = vmatmul.mubr.bf16.gmra.mrb[0].mxu0 %v1351
        %v1428 = vpop.f32.mrb[0].mxu0
        %v1429 = vadd.f32 0.0, %v1428
        %v1430 = vpop.f32.mrb[0].mxu0
        %v1431 = vpop.f32.mrb[0].mxu0
        %v1432 = vadd.f32 0.0, %v1431
        %v1433 = vpop.f32.mrb[0].mxu0
        %1434 = vmatprep.mubr.bf16.mxu0 0
        %1435 = vmatmul.mubr.bf16.gmra.mrb[0].mxu0 %v1354
        %v1436 = vpop.f32.mrb[0].mxu0
        %v1437 = vadd.f32 0.0, %v1436
        %v1438 = vpop.f32.mrb[0].mxu0
        %v1439 = vpop.f32.mrb[0].mxu0
        %v1440 = vadd.f32 0.0, %v1439
        %v1441 = vpop.f32.mrb[0].mxu0
        %1442 = vmatprep.mubr.bf16.mxu0 0
        %1443 = vmatmul.mubr.bf16.gmra.mrb[0].mxu0 %v1357
        %v1444 = vpop.f32.mrb[0].mxu0
        %v1445 = vadd.f32 0.0, %v1444
        %v1446 = vpop.f32.mrb[0].mxu0
        %v1447 = vpop.f32.mrb[0].mxu0
        %v1448 = vadd.f32 0.0, %v1447
        %v1449 = vpop.f32.mrb[0].mxu0
        %1450 = vmatprep.mubr.bf16.mxu0 0
        %1451 = vmatmul.mubr.bf16.gmra.mrb[0].mxu0 %v1360
        %v1452 = vpop.f32.mrb[0].mxu0
        %v1453 = vadd.f32 0.0, %v1452
        %v1454 = vpop.f32.mrb[0].mxu0
        %v1455 = vpop.f32.mrb[0].mxu0
        %v1456 = vadd.f32 0.0, %v1455
        %v1457 = vpop.f32.mrb[0].mxu0
        %1458 = vdwg.mxu0
        %v1459 = vld [vmem:[%s5] sm:$0xff]
        %v1460 = vld [vmem:[%s5 + $0x8] sm:$0xff]
        %v1461 = vmul.f32 %v1397, %v649
        %v1462 = vmul.f32 %v1400, %v650
        %v1463 = vmul.f32 %v1405, %v651
        %v1464 = vmul.f32 %v1408, %v652
        %v1465 = vmul.f32 %v1413, %v653
        %v1466 = vmul.f32 %v1416, %v654
        %v1467 = vmul.f32 %v1421, %v655
        %v1468 = vmul.f32 %v1424, %v656
        %v1469 = vmul.f32 %v1429, %v657
        %v1470 = vmul.f32 %v1432, %v658
        %v1471 = vmul.f32 %v1437, %v659
        %v1472 = vmul.f32 %v1440, %v660
        %v1473 = vmul.f32 %v1445, %v661
        %v1474 = vmul.f32 %v1448, %v662
        %v1475 = vmul.f32 %v1453, %v663
        %v1476 = vmul.f32 %v1456, %v664
        %v1477 = vld [vmem:[%s7] sm:$0x1]
        %v1479 = vlaneseq
        %v1480 = vshrl.u32 %v1479, 7
        %v1481 = vsub.s32 0, %v1480
        %v1482 = vrot.slane %v1477, %v1481
        %1484 = vmatprep.subr.mxu0 0.0
        %1485 = vmatpush1.msra.mxu0 %v1461
        %1486 = vmatprep.subr.mxu0 0.0
        %1487 = vmatpush1.msra.mxu0 %v1462
        %1488 = vmatprep.subr.mxu0 0.0
        %1489 = vmatpush1.msra.mxu0 %v1463
        %1490 = vmatprep.subr.mxu0 0.0
        %1491 = vmatpush1.msra.mxu0 %v1464
        %1492 = vmatprep.subr.mxu0 0.0
        %1493 = vmatpush1.msra.mxu0 %v1465
        %1494 = vmatprep.subr.mxu0 0.0
        %1495 = vmatpush1.msra.mxu0 %v1466
        %1496 = vmatprep.subr.mxu0 0.0
        %1497 = vmatpush1.msra.mxu0 %v1467
        %1498 = vmatprep.subr.mxu0 0.0
        %1499 = vmatpush1.msra.mxu0 %v1468
        %1500 = vmatprep.subr.mxu0 0.0
        %1501 = vmatpush1.msra.mxu0 %v1469
        %1502 = vmatprep.subr.mxu0 0.0
        %1503 = vmatpush1.msra.mxu0 %v1470
        %1504 = vmatprep.subr.mxu0 0.0
        %1505 = vmatpush1.msra.mxu0 %v1471
        %1506 = vmatprep.subr.mxu0 0.0
        %1507 = vmatpush1.msra.mxu0 %v1472
        %1508 = vmatprep.subr.mxu0 0.0
        %1509 = vmatpush1.msra.mxu0 %v1473
        %1510 = vmatprep.subr.mxu0 0.0
        %1511 = vmatpush1.msra.mxu0 %v1474
        %1512 = vmatprep.subr.mxu0 0.0
        %1513 = vmatpush1.msra.mxu0 %v1475
        %1514 = vmatprep.subr.mxu0 0.0
        %1515 = vmatpush1.msra.mxu0 %v1476
        %1516 = vmatprep.subr.mxu0 0.0
        %1517 = vmatpush1.msra.mxu0 0.0
        %1518 = vmatprep.subr.mxu0 0.0
        %1519 = vmatpush1.msra.mxu0 0.0
        %1520 = vmatprep.subr.mxu0 0.0
        %1521 = vmatpush1.msra.mxu0 0.0
        %1522 = vmatprep.subr.mxu0 0.0
        %1523 = vmatpush1.msra.mxu0 0.0
        %1524 = vmatprep.subr.mxu0 0.0
        %1525 = vmatpush1.msra.mxu0 0.0
        %1526 = vmatprep.subr.mxu0 0.0
        %1527 = vmatpush1.msra.mxu0 0.0
        %1528 = vmatprep.subr.mxu0 0.0
        %1529 = vmatpush1.msra.mxu0 0.0
        %1530 = vmatprep.subr.mxu0 0.0
        %1531 = vmatpush1.msra.mxu0 0.0
        %1532 = vmatprep.subr.mxu0 0.0
        %1533 = vmatpush1.msra.mxu0 0.0
        %1534 = vmatprep.subr.mxu0 0.0
        %1535 = vmatpush1.msra.mxu0 0.0
        %1536 = vmatprep.subr.mxu0 0.0
        %1537 = vmatpush1.msra.mxu0 0.0
        %1538 = vmatprep.subr.mxu0 0.0
        %1539 = vmatpush1.msra.mxu0 0.0
        %1540 = vmatprep.subr.mxu0 0.0
        %1541 = vmatpush1.msra.mxu0 0.0
        %1542 = vmatprep.subr.mxu0 0.0
        %1543 = vmatpush1.msra.mxu0 0.0
        %1544 = vmatprep.subr.mxu0 0.0
        %1545 = vmatpush1.msra.mxu0 0.0
        %1546 = vmatprep.subr.mxu0 0.0
        %1547 = vmatpush1.msra.mxu0 0.0
        %1548 = vmatprep.mubr.f32.mxu0 0.0
        %1549 = vmatmul.mubr.f32.gmra.mrb[0].mxu0 %v1459
        %v1550 = vpop.f32.mrb[0].mxu0
        %v1551 = vadd.f32 %v1482, %v1550
        %v1552 = vpop.f32.mrb[0].mxu0
        %1553 = vmatprep.mubr.f32.mxu0 0.0
        %1554 = vmatmul.mubr.f32.gmra.mrb[0].mxu0 %v1460
        %v1555 = vpop.f32.mrb[0].mxu0
        %v1556 = vadd.f32 %v1482, %v1555
        %v1557 = vpop.f32.mrb[0].mxu0
        %1558 = vdwg.mxu0
        %v1559 = vmax.f32 %v1551, 0.0
        %v1560 = vmax.f32 %v1556, 0.0
        %1561 = vst [vmem:[%s370] sm:$0xff] %v1559
        %1562 = vst [vmem:[%s370 + $0x8] sm:$0xff] %v1560
        %s1563 = sand.u32 %s232, 1
        %s1564 = scalar_lea.sflag [#allocation4], %s1563
        %s1565 = sand.u32 %s232, 1
        %s1566 = smul.addr %s1565, 16
        %s1567 = scalar_lea.vmem [#allocation7], %s1566
        // Predicated region
        $region65: #{tpu_custom_call.1} parent=55 // pred_check
          %p1568 = pneg %p242
        $region66: #{tpu_custom_call.1} parent=55 // pred_check_branch
          %1570 = sbr.rel (%p1568) target = $region68
        $region67: #{tpu_custom_call.1} parent=55 // pred_region
          %s1572 = ssub.s32 256, 256
          %1573 = vsyncadd %s1564, %s1572
          %s1574 = smul.addr %s25, 2
          %s1575 = smul.addr %s1574, 128
          %s1576 = scalar_lea.hbm %s9, %s1575
          %s1577 = sshll.u32 %s1567, 4
          %s1578 = int_to_ptr.vmem [resolvable:$true] %s1577
          %1583 = dma.vmem_to_hbm [thread:$0]  %s1578, 256, %s1576, %s1564, 128, 128, 8
        $region68: #{tpu_custom_call.1} parent=55 // pred_fallthru
          _
      $region56: #{tpu_custom_call.1} parent=5 // pred_fallthru
        _
      %p1584 = scmp.le.s32.totalorder 2, %s20
      // Predicated region
      $region69: #{tpu_custom_call.1} parent=5 // pred_check
        %p1585 = pneg %p1584
      $region70: #{tpu_custom_call.1} parent=5 // pred_check_branch
        %1587 = sbr.rel (%p1585) target = $region72
      $region71: #{tpu_custom_call.1} parent=5 // pred_region
        %s1588 = ssub.s32 %s20, 2
        // Predicated region
        $region73: #{tpu_custom_call.1} parent=71 // pred_check
          %p1589 = pneg %p248
        $region74: #{tpu_custom_call.1} parent=71 // pred_check_branch
          %1591 = sbr.rel (%p1589) target = $region76
        $region75: #{tpu_custom_call.1} parent=71 // pred_region
          %s1592 = sand.u32 %s233, 1
          %s1593 = scalar_lea.sflag [#allocation4], %s1592
          %s1594 = sand.u32 %s233, 1
          %s1595 = smul.addr %s1594, 16
          %s1596 = scalar_lea.vmem [#allocation7], %s1595
          %1597 = dma.done %s1593, 256
        $region76: #{tpu_custom_call.1} parent=71 // pred_fallthru
          _
      $region72: #{tpu_custom_call.1} parent=5 // pred_fallthru
        _
    $region6: #{tpu_custom_call.1} parent=1 // loop_footer
      %s24 = sadd.s32 1, %s20
    $region7: #{tpu_custom_call.1} parent=1 // loop_footer_branch
      %19 = sbr.rel target = $region3
    $region8: #{tpu_custom_call.1} parent=1 // loop_exit
      _
    %1598 = vsyncpa [#allocation3], 1
    %s1599 = scalar_lea.sflag [#allocation3], 1
    %1600 = vsyncpa %s1599, 1
    %1601 = vsyncpa [#allocation6], 1
    %1602 = vsyncpa [#allocation4], 1
    %s1603 = scalar_lea.sflag [#allocation4], 1
    %1604 = vsyncpa %s1603, 1

</llo_original>
